<compile_context>
chip_gen: v7x
topology: tpu7x:2x2x1
jax: 0.10.0
libtpu: 0.0.40
codegen_flags: <defaults>
</compile_context>

<pallas_src>
import jax
import jax.numpy as jnp
from jax.experimental import pallas as pl
from jax.experimental.pallas import tpu as pltpu


def _round_up(v, m):
    return ((v + m - 1) // m) * m


def _pad2(a, rows, cols):
    return jnp.pad(a, ((0, rows - a.shape[0]), (0, cols - a.shape[1])))


# ----------------------------- fused Pallas kernel -----------------------------

def _gin_fused_kernel(adj_ref, x_ref, wenc_ref, benc_ref,
                      w1_ref, b1_ref, w2_ref, b2_ref, bns_ref, bnb_ref, self_ref,
                      pool_ref, wout_ref, bout_ref,
                      out_ref,
                      h_ref):
    """Grid = (n_layers,). h_ref is a VMEM f32 scratch holding node features."""
    l = pl.program_id(0)

    # --- node encoder Linear: runs once, result kept resident in VMEM ---
    @pl.when(l == 0)
    def _():
        h_ref[...] = (
            jnp.dot(x_ref[...], wenc_ref[...], preferred_element_type=jnp.float32)
            + benc_ref[...]
        )

    # --- one GIN layer: agg = A @ h ; t = agg + (1+eps)*h ; h = relu(MLP(t)) ---
    h = h_ref[...]                                           # f32 [Np, Hp]
    agg = jnp.dot(adj_ref[...], h.astype(jnp.bfloat16),
                  preferred_element_type=jnp.float32)        # sum aggregation
    t = agg + self_ref[0] * h                                # (1 + eps) * x_r
    t = jnp.maximum(
        jnp.dot(t.astype(jnp.bfloat16), w1_ref[0],
                preferred_element_type=jnp.float32) + b1_ref[0], 0.0)
    t = jnp.maximum(
        jnp.dot(t.astype(jnp.bfloat16), w2_ref[0],
                preferred_element_type=jnp.float32) + b2_ref[0], 0.0)
    t = t * bns_ref[0] + bnb_ref[0]          # BatchNorm1d (eval mode, folded)
    h_ref[...] = jnp.maximum(t, 0.0)         # outer ReLU; dropout = identity

    # --- readout: global_add_pool + fc_out (last grid step only) ---
    @pl.when(l == pl.num_programs(0) - 1)
    def _():
        pooled = jnp.dot(pool_ref[...], h_ref[...].astype(jnp.bfloat16),
                         preferred_element_type=jnp.float32)
        out_ref[...] = (
            jnp.dot(pooled.astype(jnp.bfloat16), wout_ref[...],
                    preferred_element_type=jnp.float32)
            + bout_ref[...]
        )


# ---------------------------------- wrapper ------------------------------------

def gin_forward(params, x, edge_index, batch, num_graphs, edge_atten=None):
    """Full GIN.forward (eval mode) via one fused Pallas kernel."""
    n, d = x.shape
    h_dim = params["w_enc"].shape[1]
    c_dim = params["w_out"].shape[1]
    layers = params["layers"]
    n_layers = len(layers)

    # lane/sublane-friendly padded dims (dense MXU tiles, unmasked stores)
    np_ = _round_up(n, 128)
    dp = _round_up(d, 128)
    hp = _round_up(h_dim, 128)
    cp = _round_up(c_dim, 128)
    gp = _round_up(num_graphs, 8)

    src, tgt = edge_index[0], edge_index[1]
    ea = (jnp.ones((src.shape[0],), jnp.float32) if edge_atten is None
          else edge_atten.reshape(-1).astype(jnp.float32))
    # dense aggregation matrix: adj[i, j] = sum of edge_atten over edges j -> i
    adj = jnp.zeros((np_, np_), jnp.float32).at[tgt, src].add(ea)
    # global_add_pool as a [G, N] 0/1 matrix (padded cols/rows are zero)
    pool = (batch[None, :] == jnp.arange(num_graphs)[:, None]).astype(jnp.float32)
    pool = _pad2(pool, gp, np_)

    x_p = _pad2(x.astype(jnp.float32), np_, dp)
    w_enc = _pad2(params["w_enc"], dp, hp)
    b_enc = _pad2(params["b_enc"], 1, hp)
    w_out = _pad2(params["w_out"], hp, cp)
    b_out = _pad2(params["b_out"], 1, cp)

    w1s = jnp.stack([_pad2(lay["w1"], hp, hp) for lay in layers]).astype(jnp.bfloat16)
    w2s = jnp.stack([_pad2(lay["w2"], hp, hp) for lay in layers]).astype(jnp.bfloat16)
    b1s = jnp.stack([_pad2(lay["b1"], 1, hp) for lay in layers])
    b2s = jnp.stack([_pad2(lay["b2"], 1, hp) for lay in layers])
    bns = jnp.stack([_pad2(lay["bn_scale"], 1, hp) for lay in layers])
    bnb = jnp.stack([_pad2(lay["bn_shift"], 1, hp) for lay in layers])
    selfw = jnp.stack([jnp.full((1, hp), 1.0 + float(lay.get("eps", 0.0)),
                                jnp.float32) for lay in layers])        # [L,1,Hp]

    operands = (
        adj.astype(jnp.bfloat16), x_p.astype(jnp.bfloat16),
        w_enc.astype(jnp.bfloat16), b_enc,
        w1s, b1s, w2s, b2s, bns, bnb, selfw,
        pool.astype(jnp.bfloat16), w_out.astype(jnp.bfloat16), b_out,
    )

    flops = 2 * (np_ * dp * hp
                 + n_layers * (np_ * np_ * hp + 2 * np_ * hp * hp)
                 + gp * np_ * hp + gp * hp * cp)
    bytes_accessed = (sum(int(a.size) * a.dtype.itemsize for a in operands)
                      + gp * cp * 4)

    const = lambda l: (0, 0)        # resident across all layers (fetched once)
    per_layer_mat = lambda l: (l, 0, 0)

    grid_spec = pltpu.PrefetchScalarGridSpec(
        num_scalar_prefetch=0,
        grid=(n_layers,),
        in_specs=[
            pl.BlockSpec((np_, np_), const),        # adjacency (bf16)
            pl.BlockSpec((np_, dp), const),         # node features (bf16)
            pl.BlockSpec((dp, hp), const),          # encoder W (bf16)
            pl.BlockSpec((1, hp), const),           # encoder b (f32)
            pl.BlockSpec((1, hp, hp), per_layer_mat),   # W1 (bf16)
            pl.BlockSpec((1, 1, hp), per_layer_mat),    # b1 (f32)
            pl.BlockSpec((1, hp, hp), per_layer_mat),   # W2 (bf16)
            pl.BlockSpec((1, 1, hp), per_layer_mat),    # b2 (f32)
            pl.BlockSpec((1, 1, hp), per_layer_mat),    # bn scale (f32)
            pl.BlockSpec((1, 1, hp), per_layer_mat),    # bn shift (f32)
            pl.BlockSpec((1, 1, hp), per_layer_mat),    # (1 + eps) (f32)
            pl.BlockSpec((gp, np_), const),         # pooling matrix (bf16)
            pl.BlockSpec((hp, cp), const),          # fc_out W (bf16)
            pl.BlockSpec((1, cp), const),           # fc_out b (f32)
        ],
        out_specs=pl.BlockSpec((gp, cp), const),
        scratch_shapes=[pltpu.VMEM((np_, hp), jnp.float32)],   # resident h
    )

    out_padded = pl.pallas_call(
        _gin_fused_kernel,
        out_shape=jax.ShapeDtypeStruct((gp, cp), jnp.float32),
        grid_spec=grid_spec,
        compiler_params=pltpu.CompilerParams(
            # layer axis carries h state in scratch -> sequential
            dimension_semantics=("arbitrary",),
            vmem_limit_bytes=48 * 1024 * 1024,
        ),
        cost_estimate=pl.CostEstimate(flops=flops, transcendentals=0,
                                      bytes_accessed=bytes_accessed),
    )(*operands)

    return out_padded[:num_graphs, :c_dim]


# --------------------------------- reference ------------------------------------

def gin_forward_ref(params, x, edge_index, batch, num_graphs, edge_atten=None):
    n = x.shape[0]
    src, tgt = edge_index[0], edge_index[1]
    ea = (jnp.ones((src.shape[0],), jnp.float32) if edge_atten is None
          else edge_atten.reshape(-1).astype(jnp.float32))
    adj = jnp.zeros((n, n), jnp.float32).at[tgt, src].add(ea)
    pool = (batch[None, :] == jnp.arange(num_graphs)[:, None]).astype(jnp.float32)
    h = x @ params["w_enc"] + params["b_enc"]
    for layer in params["layers"]:
        agg = adj @ h
        t = agg + (1.0 + layer.get("eps", 0.0)) * h
        t = jnp.maximum(t @ layer["w1"] + layer["b1"], 0.0)
        t = jnp.maximum(t @ layer["w2"] + layer["b2"], 0.0)
        t = t * layer["bn_scale"] + layer["bn_shift"]
        h = jnp.maximum(t, 0.0)
    return (pool @ h) @ params["w_out"] + params["b_out"]


# ----------------------------------- main ----------------------------------------

if __name__ == "__main__":
    key = jax.random.PRNGKey(0)
    ks = jax.random.split(key, 20)

    # small shapes: 16 nodes, input_dim=8, hidden=32, 2 GIN layers,
    # 40 edges, 2 graphs, num_class=3 (multi-class -> fc_out dim = 3)
    N, D, H, E, G, C, L = 16, 8, 32, 40, 2, 3, 2
    BN_EPS = 1e-5

    x = jax.random.normal(ks[0], (N, D), jnp.float32)
    src = jax.random.randint(ks[1], (E,), 0, N)
    tgt = jax.random.randint(ks[2], (E,), 0, N)
    edge_index = jnp.stack([src, tgt], axis=0)               # [2, E]
    edge_atten = jax.random.uniform(ks[3], (E, 1), jnp.float32)
    batch = jnp.sort(jax.random.randint(ks[4], (N,), 0, G))  # node -> graph id

    def w_init(k, shape, scale=0.1):
        return scale * jax.random.normal(k, shape, jnp.float32)

    params = {
        "w_enc": w_init(ks[5], (D, H)),
        "b_enc": w_init(ks[6], (1, H)),
        "layers": [],
        "w_out": w_init(ks[7], (H, C)),
        "b_out": w_init(ks[8], (1, C)),
    }
    for li in range(L):
        kl = jax.random.split(ks[9 + li], 4)
        gamma = jnp.ones((1, H), jnp.float32)        # BatchNorm1d default init
        beta = jnp.zeros((1, H), jnp.float32)
        running_mean = jnp.zeros((1, H), jnp.float32)
        running_var = jnp.ones((1, H), jnp.float32)
        bn_scale = gamma / jnp.sqrt(running_var + BN_EPS)
        bn_shift = beta - running_mean * bn_scale
        params["layers"].append({
            "w1": w_init(kl[0], (H, H)),
            "b1": w_init(kl[1], (1, H)),
            "w2": w_init(kl[2], (H, H)),
            "b2": w_init(kl[3], (1, H)),
            "bn_scale": bn_scale,
            "bn_shift": bn_shift,
            "eps": 0.0,                               # GINConv eps (default 0)
        })

    out = gin_forward(params, x, edge_index, batch, G, edge_atten=edge_atten)
    out = jax.block_until_ready(out)

    ref = gin_forward_ref(params, x, edge_index, batch, G, edge_atten=edge_atten)
    assert out.shape == (G, C)
    # bf16 MXU inputs with f32 accumulation -> tolerance appropriate for bf16
    assert jnp.allclose(out, ref, atol=3e-2, rtol=3e-2), (
        out, ref, float(jnp.max(jnp.abs(out - ref))))

    print("KERNEL_OK")
</pallas_src>

<mosaic_0001>
module attributes {stable_mosaic.version = 11 : i64} {
  func.func @_gin_fused_kernel(%arg0: i32, %arg1: memref<128x128xbf16, #tpu.memory_space<vmem>>, %arg2: memref<128x128xbf16, #tpu.memory_space<vmem>>, %arg3: memref<128x128xbf16, #tpu.memory_space<vmem>>, %arg4: memref<1x128xf32, #tpu.memory_space<vmem>>, %arg5: memref<1x128x128xbf16, #tpu.memory_space<vmem>>, %arg6: memref<1x1x128xf32, #tpu.memory_space<vmem>>, %arg7: memref<1x128x128xbf16, #tpu.memory_space<vmem>>, %arg8: memref<1x1x128xf32, #tpu.memory_space<vmem>>, %arg9: memref<1x1x128xf32, #tpu.memory_space<vmem>>, %arg10: memref<1x1x128xf32, #tpu.memory_space<vmem>>, %arg11: memref<1x1x128xf32, #tpu.memory_space<vmem>>, %arg12: memref<8x128xbf16, #tpu.memory_space<vmem>>, %arg13: memref<128x128xbf16, #tpu.memory_space<vmem>>, %arg14: memref<1x128xf32, #tpu.memory_space<vmem>>, %arg15: memref<8x128xf32, #tpu.memory_space<vmem>>, %arg16: memref<128x128xf32, #tpu.memory_space<vmem>>) attributes {dimension_semantics = [#tpu.dimension_semantics<arbitrary>], iteration_bounds = array<i64: 2>, scalar_prefetch = 0 : i64, scratch_operands = 1 : i64, tpu.core_type = #tpu.core_type<tc>, window_params = [{pipeline_mode = #tpu.pipeline_mode<synchronous>, transform_indices = @transform_0, window_bounds = array<i64: 128, 128>}, {pipeline_mode = #tpu.pipeline_mode<synchronous>, transform_indices = @transform_1, window_bounds = array<i64: 128, 128>}, {pipeline_mode = #tpu.pipeline_mode<synchronous>, transform_indices = @transform_2, window_bounds = array<i64: 128, 128>}, {pipeline_mode = #tpu.pipeline_mode<synchronous>, transform_indices = @transform_3, window_bounds = array<i64: 1, 128>}, {transform_indices = @transform_4, window_bounds = array<i64: 1, 128, 128>}, {transform_indices = @transform_5, window_bounds = array<i64: 1, 1, 128>}, {transform_indices = @transform_6, window_bounds = array<i64: 1, 128, 128>}, {transform_indices = @transform_7, window_bounds = array<i64: 1, 1, 128>}, {transform_indices = @transform_8, window_bounds = array<i64: 1, 1, 128>}, {transform_indices = @transform_9, window_bounds = array<i64: 1, 1, 128>}, {transform_indices = @transform_10, window_bounds = array<i64: 1, 1, 128>}, {pipeline_mode = #tpu.pipeline_mode<synchronous>, transform_indices = @transform_11, window_bounds = array<i64: 8, 128>}, {pipeline_mode = #tpu.pipeline_mode<synchronous>, transform_indices = @transform_12, window_bounds = array<i64: 128, 128>}, {pipeline_mode = #tpu.pipeline_mode<synchronous>, transform_indices = @transform_13, window_bounds = array<i64: 1, 128>}, {pipeline_mode = #tpu.pipeline_mode<synchronous>, transform_indices = @transform_14, window_bounds = array<i64: 8, 128>}]} {
    %c0_i32 = arith.constant 0 : i32
    %0 = arith.cmpi eq, %arg0, %c0_i32 : i32
    %1 = arith.extui %0 : i1 to i32
    %c0_i32_0 = arith.constant 0 : i32
    %2 = arith.cmpi ne, %1, %c0_i32_0 : i32
    scf.if %2 {
      %c0_33 = arith.constant 0 : index
      %c0_34 = arith.constant 0 : index
      %46 = vector.load %arg2[%c0_33, %c0_34] : memref<128x128xbf16, #tpu.memory_space<vmem>>, vector<128x128xbf16>
      %c0_35 = arith.constant 0 : index
      %c0_36 = arith.constant 0 : index
      %47 = vector.load %arg3[%c0_35, %c0_36] : memref<128x128xbf16, #tpu.memory_space<vmem>>, vector<128x128xbf16>
      %cst_37 = arith.constant dense<0.000000e+00> : vector<128x128xf32>
      %48 = tpu.matmul %46, %47, %cst_37 {dimension_numbers = #tpu.dot_dimension_numbers<[1], [0], [0], [1], [0, 0, 1, 1], [], []>} : vector<128x128xbf16>, vector<128x128xbf16>, vector<128x128xf32> -> vector<128x128xf32>
      %c0_38 = arith.constant 0 : index
      %c0_39 = arith.constant 0 : index
      %49 = vector.load %arg4[%c0_38, %c0_39] : memref<1x128xf32, #tpu.memory_space<vmem>>, vector<1x128xf32>
      %50 = vector.broadcast %49 : vector<1x128xf32> to vector<128x128xf32>
      %51 = arith.addf %48, %50 : vector<128x128xf32>
      %c0_40 = arith.constant 0 : index
      %c0_41 = arith.constant 0 : index
      %52 = vector.load %arg16[%c0_40, %c0_41] : memref<128x128xf32, #tpu.memory_space<vmem>>, vector<128x128xf32>
      tpu.vector_store %arg16[%c0_40, %c0_41], %51 {strides = array<i32>} : memref<128x128xf32, #tpu.memory_space<vmem>>, vector<128x128xf32>,
    } else {
    }
    %c0 = arith.constant 0 : index
    %c0_1 = arith.constant 0 : index
    %3 = vector.load %arg16[%c0, %c0_1] : memref<128x128xf32, #tpu.memory_space<vmem>>, vector<128x128xf32>
    %c0_2 = arith.constant 0 : index
    %c0_3 = arith.constant 0 : index
    %4 = vector.load %arg1[%c0_2, %c0_3] : memref<128x128xbf16, #tpu.memory_space<vmem>>, vector<128x128xbf16>
    %5 = arith.truncf %3 : vector<128x128xf32> to vector<128x128xbf16>
    %cst = arith.constant dense<0.000000e+00> : vector<128x128xf32>
    %6 = tpu.matmul %4, %5, %cst {dimension_numbers = #tpu.dot_dimension_numbers<[1], [0], [0], [1], [0, 0, 1, 1], [], []>} : vector<128x128xbf16>, vector<128x128xbf16>, vector<128x128xf32> -> vector<128x128xf32>
    %c0_4 = arith.constant 0 : index
    %c0_5 = arith.constant 0 : index
    %c0_6 = arith.constant 0 : index
    %7 = vector.load %arg11[%c0_4, %c0_5, %c0_6] : memref<1x1x128xf32, #tpu.memory_space<vmem>>, vector<1x1x128xf32>
    %8 = vector.shape_cast %7 : vector<1x1x128xf32> to vector<1x128xf32>
    %9 = vector.broadcast %8 : vector<1x128xf32> to vector<128x128xf32>
    %10 = arith.mulf %9, %3 : vector<128x128xf32>
    %11 = arith.addf %6, %10 : vector<128x128xf32>
    %12 = arith.truncf %11 : vector<128x128xf32> to vector<128x128xbf16>
    %c0_7 = arith.constant 0 : index
    %c0_8 = arith.constant 0 : index
    %c0_9 = arith.constant 0 : index
    %13 = vector.load %arg5[%c0_7, %c0_8, %c0_9] : memref<1x128x128xbf16, #tpu.memory_space<vmem>>, vector<1x128x128xbf16>
    %14 = vector.shape_cast %13 : vector<1x128x128xbf16> to vector<128x128xbf16>
    %cst_10 = arith.constant dense<0.000000e+00> : vector<128x128xf32>
    %15 = tpu.matmul %12, %14, %cst_10 {dimension_numbers = #tpu.dot_dimension_numbers<[1], [0], [0], [1], [0, 0, 1, 1], [], []>} : vector<128x128xbf16>, vector<128x128xbf16>, vector<128x128xf32> -> vector<128x128xf32>
    %c0_11 = arith.constant 0 : index
    %c0_12 = arith.constant 0 : index
    %c0_13 = arith.constant 0 : index
    %16 = vector.load %arg6[%c0_11, %c0_12, %c0_13] : memref<1x1x128xf32, #tpu.memory_space<vmem>>, vector<1x1x128xf32>
    %17 = vector.shape_cast %16 : vector<1x1x128xf32> to vector<1x128xf32>
    %18 = vector.broadcast %17 : vector<1x128xf32> to vector<128x128xf32>
    %19 = arith.addf %15, %18 : vector<128x128xf32>
    %cst_14 = arith.constant 0.000000e+00 : f32
    %20 = vector.broadcast %cst_14 : f32 to vector<128x128xf32>
    %21 = arith.maximumf %19, %20 : vector<128x128xf32>
    %22 = arith.truncf %21 : vector<128x128xf32> to vector<128x128xbf16>
    %c0_15 = arith.constant 0 : index
    %c0_16 = arith.constant 0 : index
    %c0_17 = arith.constant 0 : index
    %23 = vector.load %arg7[%c0_15, %c0_16, %c0_17] : memref<1x128x128xbf16, #tpu.memory_space<vmem>>, vector<1x128x128xbf16>
    %24 = vector.shape_cast %23 : vector<1x128x128xbf16> to vector<128x128xbf16>
    %cst_18 = arith.constant dense<0.000000e+00> : vector<128x128xf32>
    %25 = tpu.matmul %22, %24, %cst_18 {dimension_numbers = #tpu.dot_dimension_numbers<[1], [0], [0], [1], [0, 0, 1, 1], [], []>} : vector<128x128xbf16>, vector<128x128xbf16>, vector<128x128xf32> -> vector<128x128xf32>
    %c0_19 = arith.constant 0 : index
    %c0_20 = arith.constant 0 : index
    %c0_21 = arith.constant 0 : index
    %26 = vector.load %arg8[%c0_19, %c0_20, %c0_21] : memref<1x1x128xf32, #tpu.memory_space<vmem>>, vector<1x1x128xf32>
    %27 = vector.shape_cast %26 : vector<1x1x128xf32> to vector<1x128xf32>
    %28 = vector.broadcast %27 : vector<1x128xf32> to vector<128x128xf32>
    %29 = arith.addf %25, %28 : vector<128x128xf32>
    %cst_22 = arith.constant 0.000000e+00 : f32
    %30 = vector.broadcast %cst_22 : f32 to vector<128x128xf32>
    %31 = arith.maximumf %29, %30 : vector<128x128xf32>
    %c0_23 = arith.constant 0 : index
    %c0_24 = arith.constant 0 : index
    %c0_25 = arith.constant 0 : index
    %32 = vector.load %arg9[%c0_23, %c0_24, %c0_25] : memref<1x1x128xf32, #tpu.memory_space<vmem>>, vector<1x1x128xf32>
    %33 = vector.shape_cast %32 : vector<1x1x128xf32> to vector<1x128xf32>
    %34 = vector.broadcast %33 : vector<1x128xf32> to vector<128x128xf32>
    %35 = arith.mulf %31, %34 : vector<128x128xf32>
    %c0_26 = arith.constant 0 : index
    %c0_27 = arith.constant 0 : index
    %c0_28 = arith.constant 0 : index
    %36 = vector.load %arg10[%c0_26, %c0_27, %c0_28] : memref<1x1x128xf32, #tpu.memory_space<vmem>>, vector<1x1x128xf32>
    %37 = vector.shape_cast %36 : vector<1x1x128xf32> to vector<1x128xf32>
    %38 = vector.broadcast %37 : vector<1x128xf32> to vector<128x128xf32>
    %39 = arith.addf %35, %38 : vector<128x128xf32>
    %cst_29 = arith.constant 0.000000e+00 : f32
    %40 = vector.broadcast %cst_29 : f32 to vector<128x128xf32>
    %41 = arith.maximumf %39, %40 : vector<128x128xf32>
    %c0_30 = arith.constant 0 : index
    %c0_31 = arith.constant 0 : index
    %42 = vector.load %arg16[%c0_30, %c0_31] : memref<128x128xf32, #tpu.memory_space<vmem>>, vector<128x128xf32>
    tpu.vector_store %arg16[%c0_30, %c0_31], %41 {strides = array<i32>} : memref<128x128xf32, #tpu.memory_space<vmem>>, vector<128x128xf32>,
    %c1_i32 = arith.constant 1 : i32
    %43 = arith.cmpi eq, %arg0, %c1_i32 : i32
    %44 = arith.extui %43 : i1 to i32
    %c0_i32_32 = arith.constant 0 : i32
    %45 = arith.cmpi ne, %44, %c0_i32_32 : i32
    scf.if %45 {
      %c0_33 = arith.constant 0 : index
      %c0_34 = arith.constant 0 : index
      %46 = vector.load %arg12[%c0_33, %c0_34] : memref<8x128xbf16, #tpu.memory_space<vmem>>, vector<8x128xbf16>
      %c0_35 = arith.constant 0 : index
      %c0_36 = arith.constant 0 : index
      %47 = vector.load %arg16[%c0_35, %c0_36] : memref<128x128xf32, #tpu.memory_space<vmem>>, vector<128x128xf32>
      %48 = arith.truncf %47 : vector<128x128xf32> to vector<128x128xbf16>
      %cst_37 = arith.constant dense<0.000000e+00> : vector<8x128xf32>
      %49 = tpu.matmul %46, %48, %cst_37 {dimension_numbers = #tpu.dot_dimension_numbers<[1], [0], [0], [1], [0, 0, 1, 1], [], []>} : vector<8x128xbf16>, vector<128x128xbf16>, vector<8x128xf32> -> vector<8x128xf32>
      %50 = arith.truncf %49 : vector<8x128xf32> to vector<8x128xbf16>
      %c0_38 = arith.constant 0 : index
      %c0_39 = arith.constant 0 : index
      %51 = vector.load %arg13[%c0_38, %c0_39] : memref<128x128xbf16, #tpu.memory_space<vmem>>, vector<128x128xbf16>
      %cst_40 = arith.constant dense<0.000000e+00> : vector<8x128xf32>
      %52 = tpu.matmul %50, %51, %cst_40 {dimension_numbers = #tpu.dot_dimension_numbers<[1], [0], [0], [1], [0, 0, 1, 1], [], []>} : vector<8x128xbf16>, vector<128x128xbf16>, vector<8x128xf32> -> vector<8x128xf32>
      %c0_41 = arith.constant 0 : index
      %c0_42 = arith.constant 0 : index
      %53 = vector.load %arg14[%c0_41, %c0_42] : memref<1x128xf32, #tpu.memory_space<vmem>>, vector<1x128xf32>
      %54 = vector.broadcast %53 : vector<1x128xf32> to vector<8x128xf32>
      %55 = arith.addf %52, %54 : vector<8x128xf32>
      %c0_43 = arith.constant 0 : index
      %c0_44 = arith.constant 0 : index
      %56 = vector.load %arg15[%c0_43, %c0_44] : memref<8x128xf32, #tpu.memory_space<vmem>>, vector<8x128xf32>
      tpu.vector_store %arg15[%c0_43, %c0_44], %55 {strides = array<i32>} : memref<8x128xf32, #tpu.memory_space<vmem>>, vector<8x128xf32>,
    } else {
    }
    return
  }
  func.func @transform_0(%arg0: i32) -> (i32, i32) {
    %c0_i32 = arith.constant 0 : i32
    %c0_i32_0 = arith.constant 0 : i32
    %c0_i32_1 = arith.constant 0 : i32
    return %c0_i32, %c0_i32_0 : i32, i32
  }
  func.func @transform_1(%arg0: i32) -> (i32, i32) {
    %c0_i32 = arith.constant 0 : i32
    %c0_i32_0 = arith.constant 0 : i32
    %c0_i32_1 = arith.constant 0 : i32
    return %c0_i32, %c0_i32_0 : i32, i32
  }
  func.func @transform_2(%arg0: i32) -> (i32, i32) {
    %c0_i32 = arith.constant 0 : i32
    %c0_i32_0 = arith.constant 0 : i32
    %c0_i32_1 = arith.constant 0 : i32
    return %c0_i32, %c0_i32_0 : i32, i32
  }
  func.func @transform_3(%arg0: i32) -> (i32, i32) {
    %c0_i32 = arith.constant 0 : i32
    %c0_i32_0 = arith.constant 0 : i32
    %c0_i32_1 = arith.constant 0 : i32
    return %c0_i32, %c0_i32_0 : i32, i32
  }
  func.func @transform_4(%arg0: i32) -> (i32, i32, i32) {
    %c0_i32 = arith.constant 0 : i32
    %c0_i32_0 = arith.constant 0 : i32
    %c0_i32_1 = arith.constant 0 : i32
    return %arg0, %c0_i32, %c0_i32_0 : i32, i32, i32
  }
  func.func @transform_5(%arg0: i32) -> (i32, i32, i32) {
    %c0_i32 = arith.constant 0 : i32
    %c0_i32_0 = arith.constant 0 : i32
    %c0_i32_1 = arith.constant 0 : i32
    return %arg0, %c0_i32, %c0_i32_0 : i32, i32, i32
  }
  func.func @transform_6(%arg0: i32) -> (i32, i32, i32) {
    %c0_i32 = arith.constant 0 : i32
    %c0_i32_0 = arith.constant 0 : i32
    %c0_i32_1 = arith.constant 0 : i32
    return %arg0, %c0_i32, %c0_i32_0 : i32, i32, i32
  }
  func.func @transform_7(%arg0: i32) -> (i32, i32, i32) {
    %c0_i32 = arith.constant 0 : i32
    %c0_i32_0 = arith.constant 0 : i32
    %c0_i32_1 = arith.constant 0 : i32
    return %arg0, %c0_i32, %c0_i32_0 : i32, i32, i32
  }
  func.func @transform_8(%arg0: i32) -> (i32, i32, i32) {
    %c0_i32 = arith.constant 0 : i32
    %c0_i32_0 = arith.constant 0 : i32
    %c0_i32_1 = arith.constant 0 : i32
    return %arg0, %c0_i32, %c0_i32_0 : i32, i32, i32
  }
  func.func @transform_9(%arg0: i32) -> (i32, i32, i32) {
    %c0_i32 = arith.constant 0 : i32
    %c0_i32_0 = arith.constant 0 : i32
    %c0_i32_1 = arith.constant 0 : i32
    return %arg0, %c0_i32, %c0_i32_0 : i32, i32, i32
  }
  func.func @transform_10(%arg0: i32) -> (i32, i32, i32) {
    %c0_i32 = arith.constant 0 : i32
    %c0_i32_0 = arith.constant 0 : i32
    %c0_i32_1 = arith.constant 0 : i32
    return %arg0, %c0_i32, %c0_i32_0 : i32, i32, i32
  }
  func.func @transform_11(%arg0: i32) -> (i32, i32) {
    %c0_i32 = arith.constant 0 : i32
    %c0_i32_0 = arith.constant 0 : i32
    %c0_i32_1 = arith.constant 0 : i32
    return %c0_i32, %c0_i32_0 : i32, i32
  }
  func.func @transform_12(%arg0: i32) -> (i32, i32) {
    %c0_i32 = arith.constant 0 : i32
    %c0_i32_0 = arith.constant 0 : i32
    %c0_i32_1 = arith.constant 0 : i32
    return %c0_i32, %c0_i32_0 : i32, i32
  }
  func.func @transform_13(%arg0: i32) -> (i32, i32) {
    %c0_i32 = arith.constant 0 : i32
    %c0_i32_0 = arith.constant 0 : i32
    %c0_i32_1 = arith.constant 0 : i32
    return %c0_i32, %c0_i32_0 : i32, i32
  }
  func.func @transform_14(%arg0: i32) -> (i32, i32) {
    %c0_i32 = arith.constant 0 : i32
    %c0_i32_0 = arith.constant 0 : i32
    %c0_i32_1 = arith.constant 0 : i32
    return %c0_i32, %c0_i32_0 : i32, i32
  }
}

</mosaic_0001>

<llo_original>
// kernel: tpu_custom_call.1
$region0: #{tpu_custom_call.1}
  #allocation0 [shape = 'u32[]', space=smem, size = 0x4, offset = 0x4, fixed_abs, tag = 'smem constant byte address 0x4 - core index']
  #allocation1 [shape = 'u32[144,128]{1,0:T(1,128)}', space=vmem, size = 0x12000, scoped, tag = 'internal scratch']
  #allocation2 [shape = 'f32[128,128]{1,0:T(8,128)}', space=vmem, size = 0x10000, scoped, tag = 'scratch operand']
  %s0 = inlined_call_operand.hbm [shape: bf16[128,128], index: 0, kind: input, shape index: {}]
  %s1 = inlined_call_operand.hbm [shape: bf16[128,128], index: 1, kind: input, shape index: {}]
  %s2 = inlined_call_operand.hbm [shape: bf16[128,128], index: 2, kind: input, shape index: {}]
  %s3 = inlined_call_operand.vmem [shape: f32[1,128], index: 3, kind: input, shape index: {}]
  %s4 = inlined_call_operand.hbm [shape: bf16[2,128,128], index: 4, kind: input, shape index: {}]
  %s5 = inlined_call_operand.vmem [shape: f32[2,1,128], index: 5, kind: input, shape index: {}]
  %s6 = inlined_call_operand.hbm [shape: bf16[2,128,128], index: 6, kind: input, shape index: {}]
  %s7 = inlined_call_operand.vmem [shape: f32[2,1,128], index: 7, kind: input, shape index: {}]
  %s8 = inlined_call_operand.vmem [shape: f32[2,1,128], index: 8, kind: input, shape index: {}]
  %s9 = inlined_call_operand.vmem [shape: f32[2,1,128], index: 9, kind: input, shape index: {}]
  %s10 = inlined_call_operand.vmem [shape: f32[2,1,128], index: 10, kind: input, shape index: {}]
  %s11 = inlined_call_operand.vmem [shape: bf16[8,128], index: 11, kind: input, shape index: {}]
  %s12 = inlined_call_operand.hbm [shape: bf16[128,128], index: 12, kind: input, shape index: {}]
  %s13 = inlined_call_operand.vmem [shape: f32[1,128], index: 13, kind: input, shape index: {}]
  %s14 = inlined_call_operand.hbm [shape: f32[8,128], index: 14, kind: output, shape index: {}]
  %s15 = sld [smem:[#allocation0]]
  $region121: #{tpu_custom_call.1} parent=0
    _
  %s17 = ssub.s32 1, %s15
  %s18 = scalar_select 0, %s17, %s15
  $region1: #{tpu_custom_call.1} parent=0
    #allocation3 [shape = 'u8[32768]{0}', space=vmem, size = 0x8000, scoped, tag = 'input window, operand 0, single buffered']
    #allocation4 [shape = 's32[2]{0}', space=sflag, size = 0x8, scoped, tag = 'scoped memory for tpu_custom_call.1']
    #allocation5 [shape = 's32[2]{0}', space=sflag, size = 0x8, scoped, tag = 'scoped memory for tpu_custom_call.1']
    #allocation6 [shape = 'u8[32768]{0}', space=vmem, size = 0x8000, scoped, tag = 'input window, operand 1, single buffered']
    #allocation7 [shape = 's32[1]{0}', space=sflag, size = 0x4, scoped, tag = 'scoped memory for tpu_custom_call.1']
    #allocation8 [shape = 'u8[32768]{0}', space=vmem, size = 0x8000, scoped, tag = 'input window, operand 2, single buffered']
    #allocation9 [shape = 'u8[65536]{0}', space=vmem, size = 0x10000, scoped, tag = 'input window, operand 4']
    #allocation10 [shape = 's32[2]{0}', space=sflag, size = 0x8, scoped, tag = 'scoped memory for tpu_custom_call.1']
    #allocation11 [shape = 'u8[65536]{0}', space=vmem, size = 0x10000, scoped, tag = 'input window, operand 6']
    #allocation12 [shape = 'u8[32768]{0}', space=vmem, size = 0x8000, scoped, tag = 'input window, operand 12, single buffered']
    #allocation13 [shape = 's32[1]{0}', space=sflag, size = 0x4, scoped, tag = 'scoped memory for tpu_custom_call.1']
    #allocation14 [shape = 'u8[4096]{0}', space=vmem, size = 0x1000, scoped, tag = 'output window, operand 0, single buffered']
    %19 = vsyncpa [#allocation4], 0
    %20 = vsyncpa [#allocation7], 0
    %21 = vsyncpa [#allocation10], 0
    %s22 = scalar_lea.sflag [#allocation10], 1
    %23 = vsyncpa %s22, 0
    %24 = vsyncpa [#allocation13], 0
    %25 = vsyncpa [#allocation5], 0
    loop: start=0, step=1, limit=4
    $region2: #{tpu_custom_call.1} parent=1 // loop_pre_header
      _
    $region3: #{tpu_custom_call.1} parent=1 // loop_header
      %s27 = sphi 0, %s31
      %p28 = scmp.ge.s32.totalorder %s27, 4
      %s35 = sphi 0, %s35
      %s37 = sphi 0, %s35
      %s38 = sphi 0, %s37
      %s52 = sphi 0, %s38
      %s56 = sphi 0, %s56
      %s58 = sphi 0, %s56
      %s59 = sphi 0, %s58
      %s73 = sphi 0, %s59
      %s77 = sphi 0, %s77
      %s79 = sphi 0, %s77
      %s80 = sphi 0, %s79
      %s94 = sphi 0, %s80
      %s98 = sphi 0, %s98
      %s100 = sphi 0, %s98
      %s101 = sphi 0, %s100
      %s115 = sphi 0, %s101
      %s121 = sphi 0, %s123
      %s124 = sphi 0, %s121
      %s125 = sphi 0, %s124
      %s141 = sphi 0, %s125
      %s147 = sphi 0, %s149
      %s150 = sphi 0, %s147
      %s151 = sphi 0, %s150
      %s167 = sphi 0, %s151
      %s173 = sphi 0, %s175
      %s176 = sphi 0, %s173
      %s177 = sphi 0, %s176
      %s193 = sphi 0, %s177
      %s199 = sphi 0, %s201
      %s202 = sphi 0, %s199
      %s203 = sphi 0, %s202
      %s219 = sphi 0, %s203
      %s225 = sphi 0, %s227
      %s228 = sphi 0, %s225
      %s229 = sphi 0, %s228
      %s245 = sphi 0, %s229
      %s251 = sphi 0, %s253
      %s254 = sphi 0, %s251
      %s255 = sphi 0, %s254
      %s271 = sphi 0, %s255
      %s277 = sphi 0, %s279
      %s280 = sphi 0, %s277
      %s281 = sphi 0, %s280
      %s297 = sphi 0, %s281
      %s301 = sphi 0, %s301
      %s303 = sphi 0, %s301
      %s304 = sphi 0, %s303
      %s318 = sphi 0, %s304
      %s322 = sphi 0, %s322
      %s324 = sphi 0, %s322
      %s325 = sphi 0, %s324
      %s339 = sphi 0, %s325
      %s343 = sphi 0, %s343
      %s345 = sphi 0, %s343
      %s346 = sphi 0, %s345
      %s360 = sphi 0, %s346
      %s364 = sphi 0, %s364
      %s366 = sphi 0, %s364
      %s367 = sphi 0, %s366
      %s381 = sphi 0, %s367
    $region4: #{tpu_custom_call.1} parent=1 // loop_header_branch
      %30 = sbr.rel (%p28) target = $region8
    $region5: #{tpu_custom_call.1} parent=1 // loop_body
      %s32 = ssub.s32 %s27, 1
      %s33 = ssub.s32 %s27, 2
      %s34 = sadd.s32 %s27, 1
      %s36 = sadd.s32 %s35, 1
      %p39 = scmp.eq.s32.totalorder %s27, 1
      %p40 = scmp.ne.s32.totalorder %s35, %s37
      %p41 = scmp.eq.s32.totalorder %s27, 0
      %p42 = por %p40, %p41
      %p43 = scmp.ne.s32.totalorder %s35, %s37
      %p44 = scmp.eq.s32.totalorder %s32, 1
      %p45 = por %p43, %p44
      %p46 = scmp.ne.s32.totalorder %s37, %s38
      %p47 = scmp.eq.s32.totalorder %s32, 0
      %p48 = por %p46, %p47
      %p49 = scmp.ne.s32.totalorder %s37, %s38
      %p50 = scmp.eq.s32.totalorder %s33, 1
      %p51 = por %p49, %p50
      %p53 = scmp.ne.s32.totalorder %s38, %s52
      %p54 = scmp.eq.s32.totalorder %s33, 0
      %p55 = por %p53, %p54
      %s57 = sadd.s32 %s56, 1
      %p60 = scmp.eq.s32.totalorder %s27, 1
      %p61 = scmp.ne.s32.totalorder %s56, %s58
      %p62 = scmp.eq.s32.totalorder %s27, 0
      %p63 = por %p61, %p62
      %p64 = scmp.ne.s32.totalorder %s56, %s58
      %p65 = scmp.eq.s32.totalorder %s32, 1
      %p66 = por %p64, %p65
      %p67 = scmp.ne.s32.totalorder %s58, %s59
      %p68 = scmp.eq.s32.totalorder %s32, 0
      %p69 = por %p67, %p68
      %p70 = scmp.ne.s32.totalorder %s58, %s59
      %p71 = scmp.eq.s32.totalorder %s33, 1
      %p72 = por %p70, %p71
      %p74 = scmp.ne.s32.totalorder %s59, %s73
      %p75 = scmp.eq.s32.totalorder %s33, 0
      %p76 = por %p74, %p75
      %s78 = sadd.s32 %s77, 1
      %p81 = scmp.eq.s32.totalorder %s27, 1
      %p82 = scmp.ne.s32.totalorder %s77, %s79
      %p83 = scmp.eq.s32.totalorder %s27, 0
      %p84 = por %p82, %p83
      %p85 = scmp.ne.s32.totalorder %s77, %s79
      %p86 = scmp.eq.s32.totalorder %s32, 1
      %p87 = por %p85, %p86
      %p88 = scmp.ne.s32.totalorder %s79, %s80
      %p89 = scmp.eq.s32.totalorder %s32, 0
      %p90 = por %p88, %p89
      %p91 = scmp.ne.s32.totalorder %s79, %s80
      %p92 = scmp.eq.s32.totalorder %s33, 1
      %p93 = por %p91, %p92
      %p95 = scmp.ne.s32.totalorder %s80, %s94
      %p96 = scmp.eq.s32.totalorder %s33, 0
      %p97 = por %p95, %p96
      %s99 = sadd.s32 %s98, 1
      %p102 = scmp.eq.s32.totalorder %s27, 1
      %p103 = scmp.ne.s32.totalorder %s98, %s100
      %p104 = scmp.eq.s32.totalorder %s27, 0
      %p105 = por %p103, %p104
      %p106 = scmp.ne.s32.totalorder %s98, %s100
      %p107 = scmp.eq.s32.totalorder %s32, 1
      %p108 = por %p106, %p107
      %p109 = scmp.ne.s32.totalorder %s100, %s101
      %p110 = scmp.eq.s32.totalorder %s32, 0
      %p111 = por %p109, %p110
      %p112 = scmp.ne.s32.totalorder %s100, %s101
      %p113 = scmp.eq.s32.totalorder %s33, 1
      %p114 = por %p112, %p113
      %p116 = scmp.ne.s32.totalorder %s101, %s115
      %p117 = scmp.eq.s32.totalorder %s33, 0
      %p118 = por %p116, %p117
      %s119 = ssub.s32 %s27, %s34
      %p120 = scmp.eq.s32.totalorder %s119, 0
      %s122 = sadd.s32 %s121, 1
      %s123 = scalar_select %p120, %s121, %s122
      %p126 = pneg %p120
      %p127 = scmp.eq.s32.totalorder %s27, 1
      %p128 = por %p126, %p127
      %p129 = scmp.ne.s32.totalorder %s121, %s124
      %p130 = scmp.eq.s32.totalorder %s27, 0
      %p131 = por %p129, %p130
      %p132 = scmp.ne.s32.totalorder %s121, %s124
      %p133 = scmp.eq.s32.totalorder %s32, 1
      %p134 = por %p132, %p133
      %p135 = scmp.ne.s32.totalorder %s124, %s125
      %p136 = scmp.eq.s32.totalorder %s32, 0
      %p137 = por %p135, %p136
      %p138 = scmp.ne.s32.totalorder %s124, %s125
      %p139 = scmp.eq.s32.totalorder %s33, 1
      %p140 = por %p138, %p139
      %p142 = scmp.ne.s32.totalorder %s125, %s141
      %p143 = scmp.eq.s32.totalorder %s33, 0
      %p144 = por %p142, %p143
      %s145 = ssub.s32 %s27, %s34
      %p146 = scmp.eq.s32.totalorder %s145, 0
      %s148 = sadd.s32 %s147, 1
      %s149 = scalar_select %p146, %s147, %s148
      %p152 = pneg %p146
      %p153 = scmp.eq.s32.totalorder %s27, 1
      %p154 = por %p152, %p153
      %p155 = scmp.ne.s32.totalorder %s147, %s150
      %p156 = scmp.eq.s32.totalorder %s27, 0
      %p157 = por %p155, %p156
      %p158 = scmp.ne.s32.totalorder %s147, %s150
      %p159 = scmp.eq.s32.totalorder %s32, 1
      %p160 = por %p158, %p159
      %p161 = scmp.ne.s32.totalorder %s150, %s151
      %p162 = scmp.eq.s32.totalorder %s32, 0
      %p163 = por %p161, %p162
      %p164 = scmp.ne.s32.totalorder %s150, %s151
      %p165 = scmp.eq.s32.totalorder %s33, 1
      %p166 = por %p164, %p165
      %p168 = scmp.ne.s32.totalorder %s151, %s167
      %p169 = scmp.eq.s32.totalorder %s33, 0
      %p170 = por %p168, %p169
      %s171 = ssub.s32 %s27, %s34
      %p172 = scmp.eq.s32.totalorder %s171, 0
      %s174 = sadd.s32 %s173, 1
      %s175 = scalar_select %p172, %s173, %s174
      %p178 = pneg %p172
      %p179 = scmp.eq.s32.totalorder %s27, 1
      %p180 = por %p178, %p179
      %p181 = scmp.ne.s32.totalorder %s173, %s176
      %p182 = scmp.eq.s32.totalorder %s27, 0
      %p183 = por %p181, %p182
      %p184 = scmp.ne.s32.totalorder %s173, %s176
      %p185 = scmp.eq.s32.totalorder %s32, 1
      %p186 = por %p184, %p185
      %p187 = scmp.ne.s32.totalorder %s176, %s177
      %p188 = scmp.eq.s32.totalorder %s32, 0
      %p189 = por %p187, %p188
      %p190 = scmp.ne.s32.totalorder %s176, %s177
      %p191 = scmp.eq.s32.totalorder %s33, 1
      %p192 = por %p190, %p191
      %p194 = scmp.ne.s32.totalorder %s177, %s193
      %p195 = scmp.eq.s32.totalorder %s33, 0
      %p196 = por %p194, %p195
      %s197 = ssub.s32 %s27, %s34
      %p198 = scmp.eq.s32.totalorder %s197, 0
      %s200 = sadd.s32 %s199, 1
      %s201 = scalar_select %p198, %s199, %s200
      %p204 = pneg %p198
      %p205 = scmp.eq.s32.totalorder %s27, 1
      %p206 = por %p204, %p205
      %p207 = scmp.ne.s32.totalorder %s199, %s202
      %p208 = scmp.eq.s32.totalorder %s27, 0
      %p209 = por %p207, %p208
      %p210 = scmp.ne.s32.totalorder %s199, %s202
      %p211 = scmp.eq.s32.totalorder %s32, 1
      %p212 = por %p210, %p211
      %p213 = scmp.ne.s32.totalorder %s202, %s203
      %p214 = scmp.eq.s32.totalorder %s32, 0
      %p215 = por %p213, %p214
      %p216 = scmp.ne.s32.totalorder %s202, %s203
      %p217 = scmp.eq.s32.totalorder %s33, 1
      %p218 = por %p216, %p217
      %p220 = scmp.ne.s32.totalorder %s203, %s219
      %p221 = scmp.eq.s32.totalorder %s33, 0
      %p222 = por %p220, %p221
      %s223 = ssub.s32 %s27, %s34
      %p224 = scmp.eq.s32.totalorder %s223, 0
      %s226 = sadd.s32 %s225, 1
      %s227 = scalar_select %p224, %s225, %s226
      %p230 = pneg %p224
      %p231 = scmp.eq.s32.totalorder %s27, 1
      %p232 = por %p230, %p231
      %p233 = scmp.ne.s32.totalorder %s225, %s228
      %p234 = scmp.eq.s32.totalorder %s27, 0
      %p235 = por %p233, %p234
      %p236 = scmp.ne.s32.totalorder %s225, %s228
      %p237 = scmp.eq.s32.totalorder %s32, 1
      %p238 = por %p236, %p237
      %p239 = scmp.ne.s32.totalorder %s228, %s229
      %p240 = scmp.eq.s32.totalorder %s32, 0
      %p241 = por %p239, %p240
      %p242 = scmp.ne.s32.totalorder %s228, %s229
      %p243 = scmp.eq.s32.totalorder %s33, 1
      %p244 = por %p242, %p243
      %p246 = scmp.ne.s32.totalorder %s229, %s245
      %p247 = scmp.eq.s32.totalorder %s33, 0
      %p248 = por %p246, %p247
      %s249 = ssub.s32 %s27, %s34
      %p250 = scmp.eq.s32.totalorder %s249, 0
      %s252 = sadd.s32 %s251, 1
      %s253 = scalar_select %p250, %s251, %s252
      %p256 = pneg %p250
      %p257 = scmp.eq.s32.totalorder %s27, 1
      %p258 = por %p256, %p257
      %p259 = scmp.ne.s32.totalorder %s251, %s254
      %p260 = scmp.eq.s32.totalorder %s27, 0
      %p261 = por %p259, %p260
      %p262 = scmp.ne.s32.totalorder %s251, %s254
      %p263 = scmp.eq.s32.totalorder %s32, 1
      %p264 = por %p262, %p263
      %p265 = scmp.ne.s32.totalorder %s254, %s255
      %p266 = scmp.eq.s32.totalorder %s32, 0
      %p267 = por %p265, %p266
      %p268 = scmp.ne.s32.totalorder %s254, %s255
      %p269 = scmp.eq.s32.totalorder %s33, 1
      %p270 = por %p268, %p269
      %p272 = scmp.ne.s32.totalorder %s255, %s271
      %p273 = scmp.eq.s32.totalorder %s33, 0
      %p274 = por %p272, %p273
      %s275 = ssub.s32 %s27, %s34
      %p276 = scmp.eq.s32.totalorder %s275, 0
      %s278 = sadd.s32 %s277, 1
      %s279 = scalar_select %p276, %s277, %s278
      %p282 = pneg %p276
      %p283 = scmp.eq.s32.totalorder %s27, 1
      %p284 = por %p282, %p283
      %p285 = scmp.ne.s32.totalorder %s277, %s280
      %p286 = scmp.eq.s32.totalorder %s27, 0
      %p287 = por %p285, %p286
      %p288 = scmp.ne.s32.totalorder %s277, %s280
      %p289 = scmp.eq.s32.totalorder %s32, 1
      %p290 = por %p288, %p289
      %p291 = scmp.ne.s32.totalorder %s280, %s281
      %p292 = scmp.eq.s32.totalorder %s32, 0
      %p293 = por %p291, %p292
      %p294 = scmp.ne.s32.totalorder %s280, %s281
      %p295 = scmp.eq.s32.totalorder %s33, 1
      %p296 = por %p294, %p295
      %p298 = scmp.ne.s32.totalorder %s281, %s297
      %p299 = scmp.eq.s32.totalorder %s33, 0
      %p300 = por %p298, %p299
      %s302 = sadd.s32 %s301, 1
      %p305 = scmp.eq.s32.totalorder %s27, 1
      %p306 = scmp.ne.s32.totalorder %s301, %s303
      %p307 = scmp.eq.s32.totalorder %s27, 0
      %p308 = por %p306, %p307
      %p309 = scmp.ne.s32.totalorder %s301, %s303
      %p310 = scmp.eq.s32.totalorder %s32, 1
      %p311 = por %p309, %p310
      %p312 = scmp.ne.s32.totalorder %s303, %s304
      %p313 = scmp.eq.s32.totalorder %s32, 0
      %p314 = por %p312, %p313
      %p315 = scmp.ne.s32.totalorder %s303, %s304
      %p316 = scmp.eq.s32.totalorder %s33, 1
      %p317 = por %p315, %p316
      %p319 = scmp.ne.s32.totalorder %s304, %s318
      %p320 = scmp.eq.s32.totalorder %s33, 0
      %p321 = por %p319, %p320
      %s323 = sadd.s32 %s322, 1
      %p326 = scmp.eq.s32.totalorder %s27, 1
      %p327 = scmp.ne.s32.totalorder %s322, %s324
      %p328 = scmp.eq.s32.totalorder %s27, 0
      %p329 = por %p327, %p328
      %p330 = scmp.ne.s32.totalorder %s322, %s324
      %p331 = scmp.eq.s32.totalorder %s32, 1
      %p332 = por %p330, %p331
      %p333 = scmp.ne.s32.totalorder %s324, %s325
      %p334 = scmp.eq.s32.totalorder %s32, 0
      %p335 = por %p333, %p334
      %p336 = scmp.ne.s32.totalorder %s324, %s325
      %p337 = scmp.eq.s32.totalorder %s33, 1
      %p338 = por %p336, %p337
      %p340 = scmp.ne.s32.totalorder %s325, %s339
      %p341 = scmp.eq.s32.totalorder %s33, 0
      %p342 = por %p340, %p341
      %s344 = sadd.s32 %s343, 1
      %p347 = scmp.eq.s32.totalorder %s27, 1
      %p348 = scmp.ne.s32.totalorder %s343, %s345
      %p349 = scmp.eq.s32.totalorder %s27, 0
      %p350 = por %p348, %p349
      %p351 = scmp.ne.s32.totalorder %s343, %s345
      %p352 = scmp.eq.s32.totalorder %s32, 1
      %p353 = por %p351, %p352
      %p354 = scmp.ne.s32.totalorder %s345, %s346
      %p355 = scmp.eq.s32.totalorder %s32, 0
      %p356 = por %p354, %p355
      %p357 = scmp.ne.s32.totalorder %s345, %s346
      %p358 = scmp.eq.s32.totalorder %s33, 1
      %p359 = por %p357, %p358
      %p361 = scmp.ne.s32.totalorder %s346, %s360
      %p362 = scmp.eq.s32.totalorder %s33, 0
      %p363 = por %p361, %p362
      %s365 = sadd.s32 %s364, 1
      %p368 = scmp.eq.s32.totalorder %s27, 1
      %p369 = scmp.ne.s32.totalorder %s364, %s366
      %p370 = scmp.eq.s32.totalorder %s27, 0
      %p371 = por %p369, %p370
      %p372 = scmp.ne.s32.totalorder %s364, %s366
      %p373 = scmp.eq.s32.totalorder %s32, 1
      %p374 = por %p372, %p373
      %p375 = scmp.ne.s32.totalorder %s366, %s367
      %p376 = scmp.eq.s32.totalorder %s32, 0
      %p377 = por %p375, %p376
      %p378 = scmp.ne.s32.totalorder %s366, %s367
      %p379 = scmp.eq.s32.totalorder %s33, 1
      %p380 = por %p378, %p379
      %p382 = scmp.ne.s32.totalorder %s367, %s381
      %p383 = scmp.eq.s32.totalorder %s33, 0
      %p384 = por %p382, %p383
      %p385 = scmp.le.s32.totalorder 1, %s27
      %p386 = scmp.lt.s32.totalorder %s27, 3
      %p387 = pnand %p385, %p386
      %p388 = pneg %p387
      // Predicated region
      $region9: #{tpu_custom_call.1} parent=5 // pred_check
        _
      $region10: #{tpu_custom_call.1} parent=5 // pred_check_branch
        %390 = sbr.rel (%p387) target = $region12
      $region11: #{tpu_custom_call.1} parent=5 // pred_region
        %s391 = ssub.s32 %s27, 1
        // Predicated region
        $region13: #{tpu_custom_call.1} parent=11 // pred_check
          %p392 = pneg %p48
        $region14: #{tpu_custom_call.1} parent=11 // pred_check_branch
          %394 = sbr.rel (%p392) target = $region16
        $region15: #{tpu_custom_call.1} parent=11 // pred_region
          %s396 = ssub.s32 1024, 1024
          %397 = vsyncadd [#allocation4], %s396
          %s398 = sshll.u32 [#allocation3], 4
          %s399 = int_to_ptr.vmem [resolvable:$true] %s398
          %404 = dma.hbm_to_vmem [thread:$0]  %s0, 1024, %s399, [#allocation4], 64, 64, 4
        $region16: #{tpu_custom_call.1} parent=11 // pred_fallthru
          _
        // Predicated region
        $region17: #{tpu_custom_call.1} parent=11 // pred_check
          %p405 = pneg %p69
        $region18: #{tpu_custom_call.1} parent=11 // pred_check_branch
          %407 = sbr.rel (%p405) target = $region20
        $region19: #{tpu_custom_call.1} parent=11 // pred_region
          %s409 = ssub.s32 1024, 1024
          %410 = vsyncadd [#allocation7], %s409
          %s411 = sshll.u32 [#allocation6], 4
          %s412 = int_to_ptr.vmem [resolvable:$true] %s411
          %417 = dma.hbm_to_vmem [thread:$0]  %s1, 1024, %s412, [#allocation7], 64, 64, 4
        $region20: #{tpu_custom_call.1} parent=11 // pred_fallthru
          _
        // Predicated region
        $region21: #{tpu_custom_call.1} parent=11 // pred_check
          %p418 = pneg %p90
        $region22: #{tpu_custom_call.1} parent=11 // pred_check_branch
          %420 = sbr.rel (%p418) target = $region24
        $region23: #{tpu_custom_call.1} parent=11 // pred_region
          %s422 = ssub.s32 1024, 1024
          %423 = vsyncadd [#allocation7], %s422
          %s424 = sshll.u32 [#allocation8], 4
          %s425 = int_to_ptr.vmem [resolvable:$true] %s424
          %430 = dma.hbm_to_vmem [thread:$0]  %s2, 1024, %s425, [#allocation7], 64, 64, 4
        $region24: #{tpu_custom_call.1} parent=11 // pred_fallthru
          _
        // Predicated region
        $region25: #{tpu_custom_call.1} parent=11 // pred_check
          %p431 = pneg %p111
        $region26: #{tpu_custom_call.1} parent=11 // pred_check_branch
          %433 = sbr.rel (%p431) target = $region28
        $region27: #{tpu_custom_call.1} parent=11 // pred_region
          _
        $region28: #{tpu_custom_call.1} parent=11 // pred_fallthru
          _
        // Predicated region
        $region29: #{tpu_custom_call.1} parent=11 // pred_check
          %p434 = pneg %p314
        $region30: #{tpu_custom_call.1} parent=11 // pred_check_branch
          %436 = sbr.rel (%p434) target = $region32
        $region31: #{tpu_custom_call.1} parent=11 // pred_region
          _
        $region32: #{tpu_custom_call.1} parent=11 // pred_fallthru
          _
        // Predicated region
        $region33: #{tpu_custom_call.1} parent=11 // pred_check
          %p437 = pneg %p335
        $region34: #{tpu_custom_call.1} parent=11 // pred_check_branch
          %439 = sbr.rel (%p437) target = $region36
        $region35: #{tpu_custom_call.1} parent=11 // pred_region
          %s441 = ssub.s32 1024, 1024
          %442 = vsyncadd [#allocation13], %s441
          %s443 = sshll.u32 [#allocation12], 4
          %s444 = int_to_ptr.vmem [resolvable:$true] %s443
          %449 = dma.hbm_to_vmem [thread:$0]  %s12, 1024, %s444, [#allocation13], 64, 64, 4
        $region36: #{tpu_custom_call.1} parent=11 // pred_fallthru
          _
        // Predicated region
        $region37: #{tpu_custom_call.1} parent=11 // pred_check
          %p450 = pneg %p356
        $region38: #{tpu_custom_call.1} parent=11 // pred_check_branch
          %452 = sbr.rel (%p450) target = $region40
        $region39: #{tpu_custom_call.1} parent=11 // pred_region
          _
        $region40: #{tpu_custom_call.1} parent=11 // pred_fallthru
          _
      $region12: #{tpu_custom_call.1} parent=5 // pred_fallthru
        _
      %p453 = scmp.lt.s32.totalorder %s27, 2
      // Predicated region
      $region41: #{tpu_custom_call.1} parent=5 // pred_check
        %p454 = pneg %p453
      $region42: #{tpu_custom_call.1} parent=5 // pred_check_branch
        %456 = sbr.rel (%p454) target = $region44
      $region43: #{tpu_custom_call.1} parent=5 // pred_region
        // Predicated region
        $region45: #{tpu_custom_call.1} parent=43 // pred_check
          %p457 = pneg %p131
        $region46: #{tpu_custom_call.1} parent=43 // pred_check_branch
          %459 = sbr.rel (%p457) target = $region48
        $region47: #{tpu_custom_call.1} parent=43 // pred_region
          %s460 = sand.u32 %s27, 1
          %s461 = scalar_lea.sflag [#allocation10], %s460
          %s462 = sand.u32 %s121, 1
          %s463 = smul.addr %s462, 64
          %s464 = scalar_lea.vmem [#allocation9], %s463
          %s466 = ssub.s32 1024, 1024
          %467 = vsyncadd %s461, %s466
          %s468 = smul.addr %s27, 16
          %s469 = smul.addr %s468, 64
          %s470 = scalar_lea.hbm %s4, %s469
          %s471 = sshll.u32 %s464, 4
          %s472 = int_to_ptr.vmem [resolvable:$true] %s471
          %477 = dma.hbm_to_vmem [thread:$0]  %s470, 1024, %s472, %s461, 64, 64, 4
        $region48: #{tpu_custom_call.1} parent=43 // pred_fallthru
          _
        // Predicated region
        $region49: #{tpu_custom_call.1} parent=43 // pred_check
          %p478 = pneg %p157
        $region50: #{tpu_custom_call.1} parent=43 // pred_check_branch
          %480 = sbr.rel (%p478) target = $region52
        $region51: #{tpu_custom_call.1} parent=43 // pred_region
          %p481 = scmp.lt.s32.totalorder %s27, 1
          %s482 = scalar_select %p481, %s27, 1
          %s483 = scalar_lea.vmem %s5, %s482
        $region52: #{tpu_custom_call.1} parent=43 // pred_fallthru
          _
        // Predicated region
        $region53: #{tpu_custom_call.1} parent=43 // pred_check
          %p484 = pneg %p183
        $region54: #{tpu_custom_call.1} parent=43 // pred_check_branch
          %486 = sbr.rel (%p484) target = $region56
        $region55: #{tpu_custom_call.1} parent=43 // pred_region
          %s487 = sand.u32 %s27, 1
          %s488 = scalar_lea.sflag [#allocation10], %s487
          %s489 = sand.u32 %s173, 1
          %s490 = smul.addr %s489, 64
          %s491 = scalar_lea.vmem [#allocation11], %s490
          %s493 = ssub.s32 1024, 1024
          %494 = vsyncadd %s488, %s493
          %s495 = smul.addr %s27, 16
          %s496 = smul.addr %s495, 64
          %s497 = scalar_lea.hbm %s6, %s496
          %s498 = sshll.u32 %s491, 4
          %s499 = int_to_ptr.vmem [resolvable:$true] %s498
          %504 = dma.hbm_to_vmem [thread:$0]  %s497, 1024, %s499, %s488, 64, 64, 4
        $region56: #{tpu_custom_call.1} parent=43 // pred_fallthru
          _
        // Predicated region
        $region57: #{tpu_custom_call.1} parent=43 // pred_check
          %p505 = pneg %p209
        $region58: #{tpu_custom_call.1} parent=43 // pred_check_branch
          %507 = sbr.rel (%p505) target = $region60
        $region59: #{tpu_custom_call.1} parent=43 // pred_region
          %p508 = scmp.lt.s32.totalorder %s27, 1
          %s509 = scalar_select %p508, %s27, 1
          %s510 = scalar_lea.vmem %s7, %s509
        $region60: #{tpu_custom_call.1} parent=43 // pred_fallthru
          _
        // Predicated region
        $region61: #{tpu_custom_call.1} parent=43 // pred_check
          %p511 = pneg %p235
        $region62: #{tpu_custom_call.1} parent=43 // pred_check_branch
          %513 = sbr.rel (%p511) target = $region64
        $region63: #{tpu_custom_call.1} parent=43 // pred_region
          %p514 = scmp.lt.s32.totalorder %s27, 1
          %s515 = scalar_select %p514, %s27, 1
          %s516 = scalar_lea.vmem %s8, %s515
        $region64: #{tpu_custom_call.1} parent=43 // pred_fallthru
          _
        // Predicated region
        $region65: #{tpu_custom_call.1} parent=43 // pred_check
          %p517 = pneg %p261
        $region66: #{tpu_custom_call.1} parent=43 // pred_check_branch
          %519 = sbr.rel (%p517) target = $region68
        $region67: #{tpu_custom_call.1} parent=43 // pred_region
          %p520 = scmp.lt.s32.totalorder %s27, 1
          %s521 = scalar_select %p520, %s27, 1
          %s522 = scalar_lea.vmem %s9, %s521
        $region68: #{tpu_custom_call.1} parent=43 // pred_fallthru
          _
        // Predicated region
        $region69: #{tpu_custom_call.1} parent=43 // pred_check
          %p523 = pneg %p287
        $region70: #{tpu_custom_call.1} parent=43 // pred_check_branch
          %525 = sbr.rel (%p523) target = $region72
        $region71: #{tpu_custom_call.1} parent=43 // pred_region
          %p526 = scmp.lt.s32.totalorder %s27, 1
          %s527 = scalar_select %p526, %s27, 1
          %s528 = scalar_lea.vmem %s10, %s527
        $region72: #{tpu_custom_call.1} parent=43 // pred_fallthru
          _
      $region44: #{tpu_custom_call.1} parent=5 // pred_fallthru
        _
      %p529 = scmp.le.s32.totalorder 1, %s27
      %p530 = scmp.lt.s32.totalorder %s27, 3
      %p531 = pnand %p529, %p530
      %p532 = pneg %p531
      // Predicated region
      $region73: #{tpu_custom_call.1} parent=5 // pred_check
        _
      $region74: #{tpu_custom_call.1} parent=5 // pred_check_branch
        %534 = sbr.rel (%p531) target = $region76
      $region75: #{tpu_custom_call.1} parent=5 // pred_region
        %s535 = ssub.s32 %s27, 1
        // Predicated region
        $region77: #{tpu_custom_call.1} parent=75 // pred_check
          %p536 = pneg %p48
        $region78: #{tpu_custom_call.1} parent=75 // pred_check_branch
          %538 = sbr.rel (%p536) target = $region80
        $region79: #{tpu_custom_call.1} parent=75 // pred_region
          %539 = dma.done [#allocation4], 1024
        $region80: #{tpu_custom_call.1} parent=75 // pred_fallthru
          _
        // Predicated region
        $region81: #{tpu_custom_call.1} parent=75 // pred_check
          %p540 = pneg %p69
        $region82: #{tpu_custom_call.1} parent=75 // pred_check_branch
          %542 = sbr.rel (%p540) target = $region84
        $region83: #{tpu_custom_call.1} parent=75 // pred_region
          %543 = dma.done [#allocation7], 1024
        $region84: #{tpu_custom_call.1} parent=75 // pred_fallthru
          _
        // Predicated region
        $region85: #{tpu_custom_call.1} parent=75 // pred_check
          %p544 = pneg %p90
        $region86: #{tpu_custom_call.1} parent=75 // pred_check_branch
          %546 = sbr.rel (%p544) target = $region88
        $region87: #{tpu_custom_call.1} parent=75 // pred_region
          %547 = dma.done [#allocation7], 1024
        $region88: #{tpu_custom_call.1} parent=75 // pred_fallthru
          _
        %s548 = sand.u32 %s32, 1
        %s549 = scalar_lea.sflag [#allocation10], %s548
        %s550 = sand.u32 %s124, 1
        %s551 = smul.addr %s550, 64
        %s552 = scalar_lea.vmem [#allocation9], %s551
        // Predicated region
        $region89: #{tpu_custom_call.1} parent=75 // pred_check
          %p553 = pneg %p137
        $region90: #{tpu_custom_call.1} parent=75 // pred_check_branch
          %555 = sbr.rel (%p553) target = $region92
        $region91: #{tpu_custom_call.1} parent=75 // pred_region
          %556 = dma.done %s549, 1024
        $region92: #{tpu_custom_call.1} parent=75 // pred_fallthru
          _
        %s557 = sand.u32 %s32, 1
        %s558 = scalar_lea.sflag [#allocation10], %s557
        %s559 = sand.u32 %s176, 1
        %s560 = smul.addr %s559, 64
        %s561 = scalar_lea.vmem [#allocation11], %s560
        // Predicated region
        $region93: #{tpu_custom_call.1} parent=75 // pred_check
          %p562 = pneg %p189
        $region94: #{tpu_custom_call.1} parent=75 // pred_check_branch
          %564 = sbr.rel (%p562) target = $region96
        $region95: #{tpu_custom_call.1} parent=75 // pred_region
          %565 = dma.done %s558, 1024
        $region96: #{tpu_custom_call.1} parent=75 // pred_fallthru
          _
        // Predicated region
        $region97: #{tpu_custom_call.1} parent=75 // pred_check
          %p566 = pneg %p335
        $region98: #{tpu_custom_call.1} parent=75 // pred_check_branch
          %568 = sbr.rel (%p566) target = $region100
        $region99: #{tpu_custom_call.1} parent=75 // pred_region
          %569 = dma.done [#allocation13], 1024
        $region100: #{tpu_custom_call.1} parent=75 // pred_fallthru
          _
        %p570 = pneg %p48
        %p571 = pneg %p45
        %p572 = pneg %p69
        %p573 = pneg %p66
        %p574 = pneg %p90
        %p575 = pneg %p87
        %p576 = pneg %p111
        %p577 = pneg %p108
        %s578 = sand.u32 %s32, 1
        %s579 = scalar_lea.sflag [#allocation10], %s578
        %s580 = sand.u32 %s124, 1
        %s581 = smul.addr %s580, 64
        %s582 = scalar_lea.vmem [#allocation9], %s581
        %p583 = pneg %p137
        %p584 = pneg %p134
        %p585 = scmp.lt.s32.totalorder %s32, 1
        %s586 = scalar_select %p585, %s32, 1
        %s587 = scalar_lea.vmem %s5, %s586
        %p588 = pneg %p163
        %p589 = pneg %p160
        %s590 = sand.u32 %s32, 1
        %s591 = scalar_lea.sflag [#allocation10], %s590
        %s592 = sand.u32 %s176, 1
        %s593 = smul.addr %s592, 64
        %s594 = scalar_lea.vmem [#allocation11], %s593
        %p595 = pneg %p189
        %p596 = pneg %p186
        %p597 = scmp.lt.s32.totalorder %s32, 1
        %s598 = scalar_select %p597, %s32, 1
        %s599 = scalar_lea.vmem %s7, %s598
        %p600 = pneg %p215
        %p601 = pneg %p212
        %p602 = scmp.lt.s32.totalorder %s32, 1
        %s603 = scalar_select %p602, %s32, 1
        %s604 = scalar_lea.vmem %s8, %s603
        %p605 = pneg %p241
        %p606 = pneg %p238
        %p607 = scmp.lt.s32.totalorder %s32, 1
        %s608 = scalar_select %p607, %s32, 1
        %s609 = scalar_lea.vmem %s9, %s608
        %p610 = pneg %p267
        %p611 = pneg %p264
        %p612 = scmp.lt.s32.totalorder %s32, 1
        %s613 = scalar_select %p612, %s32, 1
        %s614 = scalar_lea.vmem %s10, %s613
        %p615 = pneg %p293
        %p616 = pneg %p290
        %p617 = pneg %p314
        %p618 = pneg %p311
        %p619 = pneg %p335
        %p620 = pneg %p332
        %p621 = pneg %p356
        %p622 = pneg %p353
        %p623 = pneg %p377
        %p624 = pneg %p374
        %p625 = scmp.lt.s32.totalorder %s32, 1
        %s626 = scalar_select %p625, %s32, 1
        %s627 = scalar_lea.vmem %s5, %s626
        %p628 = scmp.lt.s32.totalorder %s32, 1
        %s629 = scalar_select %p628, %s32, 1
        %s630 = scalar_lea.vmem %s7, %s629
        %p631 = scmp.lt.s32.totalorder %s32, 1
        %s632 = scalar_select %p631, %s32, 1
        %s633 = scalar_lea.vmem %s8, %s632
        %p634 = scmp.lt.s32.totalorder %s32, 1
        %s635 = scalar_select %p634, %s32, 1
        %s636 = scalar_lea.vmem %s9, %s635
        %p637 = scmp.lt.s32.totalorder %s32, 1
        %s638 = scalar_select %p637, %s32, 1
        %s639 = scalar_lea.vmem %s10, %s638
        %p641 = scmp.eq.s32.totalorder %s32, 0
        // Predicated region
        $region101: #{tpu_custom_call.1} parent=75 // pred_check
          %p642 = pneg %p641
        $region102: #{tpu_custom_call.1} parent=75 // pred_check_branch
          %644 = sbr.rel (%p642) target = $region104
        $region103: #{tpu_custom_call.1} parent=75 // pred_region
          %v645 = vld [vmem:[#allocation6] sm:$0xf]
          %v646 = vld [vmem:[#allocation6 + $0x4] sm:$0xf]
          %v647 = vld [vmem:[#allocation6 + $0x8] sm:$0xf]
          %v648 = vld [vmem:[#allocation6 + $0xc] sm:$0xf]
          %v649 = vld [vmem:[#allocation6 + $0x10] sm:$0xf]
          %v650 = vld [vmem:[#allocation6 + $0x14] sm:$0xf]
          %v651 = vld [vmem:[#allocation6 + $0x18] sm:$0xf]
          %v652 = vld [vmem:[#allocation6 + $0x1c] sm:$0xf]
          %v653 = vld [vmem:[#allocation6 + $0x20] sm:$0xf]
          %v654 = vld [vmem:[#allocation6 + $0x24] sm:$0xf]
          %v655 = vld [vmem:[#allocation6 + $0x28] sm:$0xf]
          %v656 = vld [vmem:[#allocation6 + $0x2c] sm:$0xf]
          %v657 = vld [vmem:[#allocation6 + $0x30] sm:$0xf]
          %v658 = vld [vmem:[#allocation6 + $0x34] sm:$0xf]
          %v659 = vld [vmem:[#allocation6 + $0x38] sm:$0xf]
          %v660 = vld [vmem:[#allocation6 + $0x3c] sm:$0xf]
          %v661 = vld [vmem:[#allocation8] sm:$0xf]
          %v662 = vld [vmem:[#allocation8 + $0x4] sm:$0xf]
          %v663 = vld [vmem:[#allocation8 + $0x8] sm:$0xf]
          %v664 = vld [vmem:[#allocation8 + $0xc] sm:$0xf]
          %v665 = vld [vmem:[#allocation8 + $0x10] sm:$0xf]
          %v666 = vld [vmem:[#allocation8 + $0x14] sm:$0xf]
          %v667 = vld [vmem:[#allocation8 + $0x18] sm:$0xf]
          %v668 = vld [vmem:[#allocation8 + $0x1c] sm:$0xf]
          %v669 = vld [vmem:[#allocation8 + $0x20] sm:$0xf]
          %v670 = vld [vmem:[#allocation8 + $0x24] sm:$0xf]
          %v671 = vld [vmem:[#allocation8 + $0x28] sm:$0xf]
          %v672 = vld [vmem:[#allocation8 + $0x2c] sm:$0xf]
          %v673 = vld [vmem:[#allocation8 + $0x30] sm:$0xf]
          %v674 = vld [vmem:[#allocation8 + $0x34] sm:$0xf]
          %v675 = vld [vmem:[#allocation8 + $0x38] sm:$0xf]
          %v676 = vld [vmem:[#allocation8 + $0x3c] sm:$0xf]
          %v677 = vld [vmem:[%s3] sm:$0x1]
          %v679 = vlaneseq
          %v680 = vshrl.u32 %v679, 7
          %v681 = vsub.s32 0, %v680
          %v682 = vrot.slane %v677, %v681
          %v700 = vunpack.c.l.b16 %v645
          %v701 = vunpack.c.l.b16 %v646
          %v702 = vunpack.c.l.b16 %v647
          %v703 = vunpack.c.l.b16 %v648
          %v704 = vunpack.c.l.b16 %v649
          %v705 = vunpack.c.l.b16 %v650
          %v706 = vunpack.c.l.b16 %v651
          %v707 = vunpack.c.l.b16 %v652
          %v708 = vunpack.c.l.b16 %v653
          %v709 = vunpack.c.l.b16 %v654
          %v710 = vunpack.c.l.b16 %v655
          %v711 = vunpack.c.l.b16 %v656
          %v712 = vunpack.c.l.b16 %v657
          %v713 = vunpack.c.l.b16 %v658
          %v714 = vunpack.c.l.b16 %v659
          %v715 = vunpack.c.l.b16 %v660
          %v716 = vpack.c.b16 %v701, %v700
          %v717 = vpack.c.b16 %v703, %v702
          %v718 = vpack.c.b16 %v705, %v704
          %v719 = vpack.c.b16 %v707, %v706
          %v720 = vpack.c.b16 %v709, %v708
          %v721 = vpack.c.b16 %v711, %v710
          %v722 = vpack.c.b16 %v713, %v712
          %v723 = vpack.c.b16 %v715, %v714
          %v748 = vunpack.c.l.b16 %v661
          %v749 = vunpack.c.l.b16 %v662
          %v750 = vunpack.c.l.b16 %v663
          %v751 = vunpack.c.l.b16 %v664
          %v752 = vunpack.c.l.b16 %v665
          %v753 = vunpack.c.l.b16 %v666
          %v754 = vunpack.c.l.b16 %v667
          %v755 = vunpack.c.l.b16 %v668
          %v756 = vunpack.c.l.b16 %v669
          %v757 = vunpack.c.l.b16 %v670
          %v758 = vunpack.c.l.b16 %v671
          %v759 = vunpack.c.l.b16 %v672
          %v760 = vunpack.c.l.b16 %v673
          %v761 = vunpack.c.l.b16 %v674
          %v762 = vunpack.c.l.b16 %v675
          %v763 = vunpack.c.l.b16 %v676
          %v764 = vpack.c.b16 %v749, %v748
          %v765 = vpack.c.b16 %v751, %v750
          %v766 = vpack.c.b16 %v753, %v752
          %v767 = vpack.c.b16 %v755, %v754
          %v768 = vpack.c.b16 %v757, %v756
          %v769 = vpack.c.b16 %v759, %v758
          %v770 = vpack.c.b16 %v761, %v760
          %v771 = vpack.c.b16 %v763, %v762
          %780 = vmatprep.subr.bf16.mxu0 0
          %781 = vmatpush1.bf16.msra.mxu0 %v764
          %782 = vmatprep.subr.bf16.mxu0 0
          %783 = vmatpush1.bf16.msra.mxu0 %v765
          %784 = vmatprep.subr.bf16.mxu0 0
          %785 = vmatpush1.bf16.msra.mxu0 %v766
          %786 = vmatprep.subr.bf16.mxu0 0
          %787 = vmatpush1.bf16.msra.mxu0 %v767
          %788 = vmatprep.subr.bf16.mxu0 0
          %789 = vmatpush1.bf16.msra.mxu0 %v768
          %790 = vmatprep.subr.bf16.mxu0 0
          %791 = vmatpush1.bf16.msra.mxu0 %v769
          %792 = vmatprep.subr.bf16.mxu0 0
          %793 = vmatpush1.bf16.msra.mxu0 %v770
          %794 = vmatprep.subr.bf16.mxu0 0
          %795 = vmatpush1.bf16.msra.mxu0 %v771
          %796 = vmatprep.subr.bf16.mxu0 0
          %797 = vmatpush1.bf16.msra.mxu0 0
          %798 = vmatprep.subr.bf16.mxu0 0
          %799 = vmatpush1.bf16.msra.mxu0 0
          %800 = vmatprep.subr.bf16.mxu0 0
          %801 = vmatpush1.bf16.msra.mxu0 0
          %802 = vmatprep.subr.bf16.mxu0 0
          %803 = vmatpush1.bf16.msra.mxu0 0
          %804 = vmatprep.subr.bf16.mxu0 0
          %805 = vmatpush1.bf16.msra.mxu0 0
          %806 = vmatprep.subr.bf16.mxu0 0
          %807 = vmatpush1.bf16.msra.mxu0 0
          %808 = vmatprep.subr.bf16.mxu0 0
          %809 = vmatpush1.bf16.msra.mxu0 0
          %810 = vmatprep.subr.bf16.mxu0 0
          %811 = vmatpush1.bf16.msra.mxu0 0
          %812 = vmatprep.mubr.bf16.mxu0 0
          %813 = vmatmul.mubr.bf16.gmra.mrb[0].mxu0 %v716
          %v814 = vpop.f32.mrb[0].mxu0
          %v815 = vadd.f32 %v682, %v814
          %v816 = vpop.f32.mrb[0].mxu0
          %v817 = vpop.f32.mrb[0].mxu0
          %v818 = vadd.f32 %v682, %v817
          %v819 = vpop.f32.mrb[0].mxu0
          %820 = vmatprep.mubr.bf16.mxu0 0
          %821 = vmatmul.mubr.bf16.gmra.mrb[0].mxu0 %v717
          %v822 = vpop.f32.mrb[0].mxu0
          %v823 = vadd.f32 %v682, %v822
          %v824 = vpop.f32.mrb[0].mxu0
          %v825 = vpop.f32.mrb[0].mxu0
          %v826 = vadd.f32 %v682, %v825
          %v827 = vpop.f32.mrb[0].mxu0
          %828 = vmatprep.mubr.bf16.mxu0 0
          %829 = vmatmul.mubr.bf16.gmra.mrb[0].mxu0 %v718
          %v830 = vpop.f32.mrb[0].mxu0
          %v831 = vadd.f32 %v682, %v830
          %v832 = vpop.f32.mrb[0].mxu0
          %v833 = vpop.f32.mrb[0].mxu0
          %v834 = vadd.f32 %v682, %v833
          %v835 = vpop.f32.mrb[0].mxu0
          %836 = vmatprep.mubr.bf16.mxu0 0
          %837 = vmatmul.mubr.bf16.gmra.mrb[0].mxu0 %v719
          %v838 = vpop.f32.mrb[0].mxu0
          %v839 = vadd.f32 %v682, %v838
          %v840 = vpop.f32.mrb[0].mxu0
          %v841 = vpop.f32.mrb[0].mxu0
          %v842 = vadd.f32 %v682, %v841
          %v843 = vpop.f32.mrb[0].mxu0
          %844 = vmatprep.mubr.bf16.mxu0 0
          %845 = vmatmul.mubr.bf16.gmra.mrb[0].mxu0 %v720
          %v846 = vpop.f32.mrb[0].mxu0
          %v847 = vadd.f32 %v682, %v846
          %v848 = vpop.f32.mrb[0].mxu0
          %v849 = vpop.f32.mrb[0].mxu0
          %v850 = vadd.f32 %v682, %v849
          %v851 = vpop.f32.mrb[0].mxu0
          %852 = vmatprep.mubr.bf16.mxu0 0
          %853 = vmatmul.mubr.bf16.gmra.mrb[0].mxu0 %v721
          %v854 = vpop.f32.mrb[0].mxu0
          %v855 = vadd.f32 %v682, %v854
          %v856 = vpop.f32.mrb[0].mxu0
          %v857 = vpop.f32.mrb[0].mxu0
          %v858 = vadd.f32 %v682, %v857
          %v859 = vpop.f32.mrb[0].mxu0
          %860 = vmatprep.mubr.bf16.mxu0 0
          %861 = vmatmul.mubr.bf16.gmra.mrb[0].mxu0 %v722
          %v862 = vpop.f32.mrb[0].mxu0
          %v863 = vadd.f32 %v682, %v862
          %v864 = vpop.f32.mrb[0].mxu0
          %v865 = vpop.f32.mrb[0].mxu0
          %v866 = vadd.f32 %v682, %v865
          %v867 = vpop.f32.mrb[0].mxu0
          %868 = vmatprep.mubr.bf16.mxu0 0
          %869 = vmatmul.mubr.bf16.gmra.mrb[0].mxu0 %v723
          %v870 = vpop.f32.mrb[0].mxu0
          %v871 = vadd.f32 %v682, %v870
          %v872 = vpop.f32.mrb[0].mxu0
          %v873 = vpop.f32.mrb[0].mxu0
          %v874 = vadd.f32 %v682, %v873
          %v875 = vpop.f32.mrb[0].mxu0
          %876 = vdwg.mxu0
          %877 = vst [vmem:[#allocation2] sm:$0xff] %v815
          %878 = vst [vmem:[#allocation2 + $0x8] sm:$0xff] %v818
          %879 = vst [vmem:[#allocation2 + $0x10] sm:$0xff] %v823
          %880 = vst [vmem:[#allocation2 + $0x18] sm:$0xff] %v826
          %881 = vst [vmem:[#allocation2 + $0x20] sm:$0xff] %v831
          %882 = vst [vmem:[#allocation2 + $0x28] sm:$0xff] %v834
          %883 = vst [vmem:[#allocation2 + $0x30] sm:$0xff] %v839
          %884 = vst [vmem:[#allocation2 + $0x38] sm:$0xff] %v842
          %885 = vst [vmem:[#allocation2 + $0x40] sm:$0xff] %v847
          %886 = vst [vmem:[#allocation2 + $0x48] sm:$0xff] %v850
          %887 = vst [vmem:[#allocation2 + $0x50] sm:$0xff] %v855
          %888 = vst [vmem:[#allocation2 + $0x58] sm:$0xff] %v858
          %889 = vst [vmem:[#allocation2 + $0x60] sm:$0xff] %v863
          %890 = vst [vmem:[#allocation2 + $0x68] sm:$0xff] %v866
          %891 = vst [vmem:[#allocation2 + $0x70] sm:$0xff] %v871
          %892 = vst [vmem:[#allocation2 + $0x78] sm:$0xff] %v874
        $region104: #{tpu_custom_call.1} parent=75 // pred_fallthru
          _
        %v893 = vld [vmem:[#allocation2] sm:$0xff]
        %v894 = vld [vmem:[#allocation2 + $0x8] sm:$0xff]
        %v895 = vld [vmem:[#allocation2 + $0x10] sm:$0xff]
        %v896 = vld [vmem:[#allocation2 + $0x18] sm:$0xff]
        %v897 = vld [vmem:[#allocation2 + $0x20] sm:$0xff]
        %v898 = vld [vmem:[#allocation2 + $0x28] sm:$0xff]
        %v899 = vld [vmem:[#allocation2 + $0x30] sm:$0xff]
        %v900 = vld [vmem:[#allocation2 + $0x38] sm:$0xff]
        %v901 = vld [vmem:[#allocation2 + $0x40] sm:$0xff]
        %v902 = vld [vmem:[#allocation2 + $0x48] sm:$0xff]
        %v903 = vld [vmem:[#allocation2 + $0x50] sm:$0xff]
        %v904 = vld [vmem:[#allocation2 + $0x58] sm:$0xff]
        %v905 = vld [vmem:[#allocation2 + $0x60] sm:$0xff]
        %v906 = vld [vmem:[#allocation2 + $0x68] sm:$0xff]
        %v907 = vld [vmem:[#allocation2 + $0x70] sm:$0xff]
        %v908 = vld [vmem:[#allocation2 + $0x78] sm:$0xff]
        %v909 = vld [vmem:[#allocation3] sm:$0xf]
        %v910 = vld [vmem:[#allocation3 + $0x4] sm:$0xf]
        %v911 = vld [vmem:[#allocation3 + $0x8] sm:$0xf]
        %v912 = vld [vmem:[#allocation3 + $0xc] sm:$0xf]
        %v913 = vld [vmem:[#allocation3 + $0x10] sm:$0xf]
        %v914 = vld [vmem:[#allocation3 + $0x14] sm:$0xf]
        %v915 = vld [vmem:[#allocation3 + $0x18] sm:$0xf]
        %v916 = vld [vmem:[#allocation3 + $0x1c] sm:$0xf]
        %v917 = vld [vmem:[#allocation3 + $0x20] sm:$0xf]
        %v918 = vld [vmem:[#allocation3 + $0x24] sm:$0xf]
        %v919 = vld [vmem:[#allocation3 + $0x28] sm:$0xf]
        %v920 = vld [vmem:[#allocation3 + $0x2c] sm:$0xf]
        %v921 = vld [vmem:[#allocation3 + $0x30] sm:$0xf]
        %v922 = vld [vmem:[#allocation3 + $0x34] sm:$0xf]
        %v923 = vld [vmem:[#allocation3 + $0x38] sm:$0xf]
        %v924 = vld [vmem:[#allocation3 + $0x3c] sm:$0xf]
        %v925 = vpack.c.bf16 %v894, %v893
        %v926 = vpack.c.bf16 %v896, %v895
        %v927 = vpack.c.bf16 %v898, %v897
        %v928 = vpack.c.bf16 %v900, %v899
        %v929 = vpack.c.bf16 %v902, %v901
        %v930 = vpack.c.bf16 %v904, %v903
        %v931 = vpack.c.bf16 %v906, %v905
        %v932 = vpack.c.bf16 %v908, %v907
        %v933 = vld [vmem:[%s639] sm:$0x1]
        %v935 = vlaneseq
        %v936 = vshrl.u32 %v935, 7
        %v937 = vsub.s32 0, %v936
        %v938 = vrot.slane %v933, %v937
        %v940 = vmul.f32 %v938, %v893
        %v941 = vmul.f32 %v938, %v894
        %v942 = vmul.f32 %v938, %v895
        %v943 = vmul.f32 %v938, %v896
        %v944 = vmul.f32 %v938, %v897
        %v945 = vmul.f32 %v938, %v898
        %v946 = vmul.f32 %v938, %v899
        %v947 = vmul.f32 %v938, %v900
        %v948 = vmul.f32 %v938, %v901
        %v949 = vmul.f32 %v938, %v902
        %v950 = vmul.f32 %v938, %v903
        %v951 = vmul.f32 %v938, %v904
        %v952 = vmul.f32 %v938, %v905
        %v953 = vmul.f32 %v938, %v906
        %v954 = vmul.f32 %v938, %v907
        %v955 = vmul.f32 %v938, %v908
        %v972 = vunpack.c.l.b16 %v909
        %v973 = vunpack.c.l.b16 %v910
        %v974 = vunpack.c.l.b16 %v911
        %v975 = vunpack.c.l.b16 %v912
        %v976 = vunpack.c.l.b16 %v913
        %v977 = vunpack.c.l.b16 %v914
        %v978 = vunpack.c.l.b16 %v915
        %v979 = vunpack.c.l.b16 %v916
        %v980 = vunpack.c.l.b16 %v917
        %v981 = vunpack.c.l.b16 %v918
        %v982 = vunpack.c.l.b16 %v919
        %v983 = vunpack.c.l.b16 %v920
        %v984 = vunpack.c.l.b16 %v921
        %v985 = vunpack.c.l.b16 %v922
        %v986 = vunpack.c.l.b16 %v923
        %v987 = vunpack.c.l.b16 %v924
        %v988 = vpack.c.b16 %v973, %v972
        %v989 = vpack.c.b16 %v975, %v974
        %v990 = vpack.c.b16 %v977, %v976
        %v991 = vpack.c.b16 %v979, %v978
        %v992 = vpack.c.b16 %v981, %v980
        %v993 = vpack.c.b16 %v983, %v982
        %v994 = vpack.c.b16 %v985, %v984
        %v995 = vpack.c.b16 %v987, %v986
        %1004 = vmatprep.subr.bf16.mxu0 0
        %1005 = vmatpush1.bf16.msra.mxu0 %v925
        %1006 = vmatprep.subr.bf16.mxu0 0
        %1007 = vmatpush1.bf16.msra.mxu0 %v926
        %1008 = vmatprep.subr.bf16.mxu0 0
        %1009 = vmatpush1.bf16.msra.mxu0 %v927
        %1010 = vmatprep.subr.bf16.mxu0 0
        %1011 = vmatpush1.bf16.msra.mxu0 %v928
        %1012 = vmatprep.subr.bf16.mxu0 0
        %1013 = vmatpush1.bf16.msra.mxu0 %v929
        %1014 = vmatprep.subr.bf16.mxu0 0
        %1015 = vmatpush1.bf16.msra.mxu0 %v930
        %1016 = vmatprep.subr.bf16.mxu0 0
        %1017 = vmatpush1.bf16.msra.mxu0 %v931
        %1018 = vmatprep.subr.bf16.mxu0 0
        %1019 = vmatpush1.bf16.msra.mxu0 %v932
        %1020 = vmatprep.subr.bf16.mxu0 0
        %1021 = vmatpush1.bf16.msra.mxu0 0
        %1022 = vmatprep.subr.bf16.mxu0 0
        %1023 = vmatpush1.bf16.msra.mxu0 0
        %1024 = vmatprep.subr.bf16.mxu0 0
        %1025 = vmatpush1.bf16.msra.mxu0 0
        %1026 = vmatprep.subr.bf16.mxu0 0
        %1027 = vmatpush1.bf16.msra.mxu0 0
        %1028 = vmatprep.subr.bf16.mxu0 0
        %1029 = vmatpush1.bf16.msra.mxu0 0
        %1030 = vmatprep.subr.bf16.mxu0 0
        %1031 = vmatpush1.bf16.msra.mxu0 0
        %1032 = vmatprep.subr.bf16.mxu0 0
        %1033 = vmatpush1.bf16.msra.mxu0 0
        %1034 = vmatprep.subr.bf16.mxu0 0
        %1035 = vmatpush1.bf16.msra.mxu0 0
        %1036 = vmatprep.mubr.bf16.mxu0 0
        %1037 = vmatmul.mubr.bf16.gmra.mrb[0].mxu0 %v988
        %v1038 = vpop.f32.mrb[0].mxu0
        %v1039 = vadd.f32 %v940, %v1038
        %v1040 = vpop.f32.mrb[0].mxu0
        %v1041 = vpop.f32.mrb[0].mxu0
        %v1042 = vadd.f32 %v941, %v1041
        %v1043 = vpop.f32.mrb[0].mxu0
        %1044 = vmatprep.mubr.bf16.mxu0 0
        %1045 = vmatmul.mubr.bf16.gmra.mrb[0].mxu0 %v989
        %v1046 = vpop.f32.mrb[0].mxu0
        %v1047 = vadd.f32 %v942, %v1046
        %v1048 = vpop.f32.mrb[0].mxu0
        %v1049 = vpop.f32.mrb[0].mxu0
        %v1050 = vadd.f32 %v943, %v1049
        %v1051 = vpop.f32.mrb[0].mxu0
        %1052 = vmatprep.mubr.bf16.mxu0 0
        %1053 = vmatmul.mubr.bf16.gmra.mrb[0].mxu0 %v990
        %v1054 = vpop.f32.mrb[0].mxu0
        %v1055 = vadd.f32 %v944, %v1054
        %v1056 = vpop.f32.mrb[0].mxu0
        %v1057 = vpop.f32.mrb[0].mxu0
        %v1058 = vadd.f32 %v945, %v1057
        %v1059 = vpop.f32.mrb[0].mxu0
        %1060 = vmatprep.mubr.bf16.mxu0 0
        %1061 = vmatmul.mubr.bf16.gmra.mrb[0].mxu0 %v991
        %v1062 = vpop.f32.mrb[0].mxu0
        %v1063 = vadd.f32 %v946, %v1062
        %v1064 = vpop.f32.mrb[0].mxu0
        %v1065 = vpop.f32.mrb[0].mxu0
        %v1066 = vadd.f32 %v947, %v1065
        %v1067 = vpop.f32.mrb[0].mxu0
        %1068 = vmatprep.mubr.bf16.mxu0 0
        %1069 = vmatmul.mubr.bf16.gmra.mrb[0].mxu0 %v992
        %v1070 = vpop.f32.mrb[0].mxu0
        %v1071 = vadd.f32 %v948, %v1070
        %v1072 = vpop.f32.mrb[0].mxu0
        %v1073 = vpop.f32.mrb[0].mxu0
        %v1074 = vadd.f32 %v949, %v1073
        %v1075 = vpop.f32.mrb[0].mxu0
        %1076 = vmatprep.mubr.bf16.mxu0 0
        %1077 = vmatmul.mubr.bf16.gmra.mrb[0].mxu0 %v993
        %v1078 = vpop.f32.mrb[0].mxu0
        %v1079 = vadd.f32 %v950, %v1078
        %v1080 = vpop.f32.mrb[0].mxu0
        %v1081 = vpop.f32.mrb[0].mxu0
        %v1082 = vadd.f32 %v951, %v1081
        %v1083 = vpop.f32.mrb[0].mxu0
        %1084 = vmatprep.mubr.bf16.mxu0 0
        %1085 = vmatmul.mubr.bf16.gmra.mrb[0].mxu0 %v994
        %v1086 = vpop.f32.mrb[0].mxu0
        %v1087 = vadd.f32 %v952, %v1086
        %v1088 = vpop.f32.mrb[0].mxu0
        %v1089 = vpop.f32.mrb[0].mxu0
        %v1090 = vadd.f32 %v953, %v1089
        %v1091 = vpop.f32.mrb[0].mxu0
        %1092 = vmatprep.mubr.bf16.mxu0 0
        %1093 = vmatmul.mubr.bf16.gmra.mrb[0].mxu0 %v995
        %v1094 = vpop.f32.mrb[0].mxu0
        %v1095 = vadd.f32 %v954, %v1094
        %v1096 = vpop.f32.mrb[0].mxu0
        %v1097 = vpop.f32.mrb[0].mxu0
        %v1098 = vadd.f32 %v955, %v1097
        %v1099 = vpop.f32.mrb[0].mxu0
        %1100 = vdwg.mxu0
        %v1101 = vpack.c.bf16 %v1042, %v1039
        %v1102 = vpack.c.bf16 %v1050, %v1047
        %v1103 = vpack.c.bf16 %v1058, %v1055
        %v1104 = vpack.c.bf16 %v1066, %v1063
        %v1105 = vpack.c.bf16 %v1074, %v1071
        %v1106 = vpack.c.bf16 %v1082, %v1079
        %v1107 = vpack.c.bf16 %v1090, %v1087
        %v1108 = vpack.c.bf16 %v1098, %v1095
        %v1109 = vld [vmem:[%s552] sm:$0xf]
        %v1110 = vld [vmem:[%s552 + $0x4] sm:$0xf]
        %v1111 = vld [vmem:[%s552 + $0x8] sm:$0xf]
        %v1112 = vld [vmem:[%s552 + $0xc] sm:$0xf]
        %v1113 = vld [vmem:[%s552 + $0x10] sm:$0xf]
        %v1114 = vld [vmem:[%s552 + $0x14] sm:$0xf]
        %v1115 = vld [vmem:[%s552 + $0x18] sm:$0xf]
        %v1116 = vld [vmem:[%s552 + $0x1c] sm:$0xf]
        %v1117 = vld [vmem:[%s552 + $0x20] sm:$0xf]
        %v1118 = vld [vmem:[%s552 + $0x24] sm:$0xf]
        %v1119 = vld [vmem:[%s552 + $0x28] sm:$0xf]
        %v1120 = vld [vmem:[%s552 + $0x2c] sm:$0xf]
        %v1121 = vld [vmem:[%s552 + $0x30] sm:$0xf]
        %v1122 = vld [vmem:[%s552 + $0x34] sm:$0xf]
        %v1123 = vld [vmem:[%s552 + $0x38] sm:$0xf]
        %v1124 = vld [vmem:[%s552 + $0x3c] sm:$0xf]
        %v1125 = vld [vmem:[%s627] sm:$0x1]
        %v1127 = vlaneseq
        %v1128 = vshrl.u32 %v1127, 7
        %v1129 = vsub.s32 0, %v1128
        %v1130 = vrot.slane %v1125, %v1129
        %v1148 = vunpack.c.l.b16 %v1109
        %v1149 = vunpack.c.l.b16 %v1110
        %v1150 = vunpack.c.l.b16 %v1111
        %v1151 = vunpack.c.l.b16 %v1112
        %v1152 = vunpack.c.l.b16 %v1113
        %v1153 = vunpack.c.l.b16 %v1114
        %v1154 = vunpack.c.l.b16 %v1115
        %v1155 = vunpack.c.l.b16 %v1116
        %v1156 = vunpack.c.l.b16 %v1117
        %v1157 = vunpack.c.l.b16 %v1118
        %v1158 = vunpack.c.l.b16 %v1119
        %v1159 = vunpack.c.l.b16 %v1120
        %v1160 = vunpack.c.l.b16 %v1121
        %v1161 = vunpack.c.l.b16 %v1122
        %v1162 = vunpack.c.l.b16 %v1123
        %v1163 = vunpack.c.l.b16 %v1124
        %v1164 = vpack.c.b16 %v1149, %v1148
        %v1165 = vpack.c.b16 %v1151, %v1150
        %v1166 = vpack.c.b16 %v1153, %v1152
        %v1167 = vpack.c.b16 %v1155, %v1154
        %v1168 = vpack.c.b16 %v1157, %v1156
        %v1169 = vpack.c.b16 %v1159, %v1158
        %v1170 = vpack.c.b16 %v1161, %v1160
        %v1171 = vpack.c.b16 %v1163, %v1162
        %1180 = vmatprep.subr.bf16.mxu0 0
        %1181 = vmatpush1.bf16.msra.mxu0 %v1164
        %1182 = vmatprep.subr.bf16.mxu0 0
        %1183 = vmatpush1.bf16.msra.mxu0 %v1165
        %1184 = vmatprep.subr.bf16.mxu0 0
        %1185 = vmatpush1.bf16.msra.mxu0 %v1166
        %1186 = vmatprep.subr.bf16.mxu0 0
        %1187 = vmatpush1.bf16.msra.mxu0 %v1167
        %1188 = vmatprep.subr.bf16.mxu0 0
        %1189 = vmatpush1.bf16.msra.mxu0 %v1168
        %1190 = vmatprep.subr.bf16.mxu0 0
        %1191 = vmatpush1.bf16.msra.mxu0 %v1169
        %1192 = vmatprep.subr.bf16.mxu0 0
        %1193 = vmatpush1.bf16.msra.mxu0 %v1170
        %1194 = vmatprep.subr.bf16.mxu0 0
        %1195 = vmatpush1.bf16.msra.mxu0 %v1171
        %1196 = vmatprep.subr.bf16.mxu0 0
        %1197 = vmatpush1.bf16.msra.mxu0 0
        %1198 = vmatprep.subr.bf16.mxu0 0
        %1199 = vmatpush1.bf16.msra.mxu0 0
        %1200 = vmatprep.subr.bf16.mxu0 0
        %1201 = vmatpush1.bf16.msra.mxu0 0
        %1202 = vmatprep.subr.bf16.mxu0 0
        %1203 = vmatpush1.bf16.msra.mxu0 0
        %1204 = vmatprep.subr.bf16.mxu0 0
        %1205 = vmatpush1.bf16.msra.mxu0 0
        %1206 = vmatprep.subr.bf16.mxu0 0
        %1207 = vmatpush1.bf16.msra.mxu0 0
        %1208 = vmatprep.subr.bf16.mxu0 0
        %1209 = vmatpush1.bf16.msra.mxu0 0
        %1210 = vmatprep.subr.bf16.mxu0 0
        %1211 = vmatpush1.bf16.msra.mxu0 0
        %1212 = vmatprep.mubr.bf16.mxu0 0
        %1213 = vmatmul.mubr.bf16.gmra.mrb[0].mxu0 %v1101
        %v1214 = vpop.f32.mrb[0].mxu0
        %v1215 = vadd.f32 %v1130, %v1214
        %v1216 = vpop.f32.mrb[0].mxu0
        %v1217 = vpop.f32.mrb[0].mxu0
        %v1218 = vadd.f32 %v1130, %v1217
        %v1219 = vpop.f32.mrb[0].mxu0
        %1220 = vmatprep.mubr.bf16.mxu0 0
        %1221 = vmatmul.mubr.bf16.gmra.mrb[0].mxu0 %v1102
        %v1222 = vpop.f32.mrb[0].mxu0
        %v1223 = vadd.f32 %v1130, %v1222
        %v1224 = vpop.f32.mrb[0].mxu0
        %v1225 = vpop.f32.mrb[0].mxu0
        %v1226 = vadd.f32 %v1130, %v1225
        %v1227 = vpop.f32.mrb[0].mxu0
        %1228 = vmatprep.mubr.bf16.mxu0 0
        %1229 = vmatmul.mubr.bf16.gmra.mrb[0].mxu0 %v1103
        %v1230 = vpop.f32.mrb[0].mxu0
        %v1231 = vadd.f32 %v1130, %v1230
        %v1232 = vpop.f32.mrb[0].mxu0
        %v1233 = vpop.f32.mrb[0].mxu0
        %v1234 = vadd.f32 %v1130, %v1233
        %v1235 = vpop.f32.mrb[0].mxu0
        %1236 = vmatprep.mubr.bf16.mxu0 0
        %1237 = vmatmul.mubr.bf16.gmra.mrb[0].mxu0 %v1104
        %v1238 = vpop.f32.mrb[0].mxu0
        %v1239 = vadd.f32 %v1130, %v1238
        %v1240 = vpop.f32.mrb[0].mxu0
        %v1241 = vpop.f32.mrb[0].mxu0
        %v1242 = vadd.f32 %v1130, %v1241
        %v1243 = vpop.f32.mrb[0].mxu0
        %1244 = vmatprep.mubr.bf16.mxu0 0
        %1245 = vmatmul.mubr.bf16.gmra.mrb[0].mxu0 %v1105
        %v1246 = vpop.f32.mrb[0].mxu0
        %v1247 = vadd.f32 %v1130, %v1246
        %v1248 = vpop.f32.mrb[0].mxu0
        %v1249 = vpop.f32.mrb[0].mxu0
        %v1250 = vadd.f32 %v1130, %v1249
        %v1251 = vpop.f32.mrb[0].mxu0
        %1252 = vmatprep.mubr.bf16.mxu0 0
        %1253 = vmatmul.mubr.bf16.gmra.mrb[0].mxu0 %v1106
        %v1254 = vpop.f32.mrb[0].mxu0
        %v1255 = vadd.f32 %v1130, %v1254
        %v1256 = vpop.f32.mrb[0].mxu0
        %v1257 = vpop.f32.mrb[0].mxu0
        %v1258 = vadd.f32 %v1130, %v1257
        %v1259 = vpop.f32.mrb[0].mxu0
        %1260 = vmatprep.mubr.bf16.mxu0 0
        %1261 = vmatmul.mubr.bf16.gmra.mrb[0].mxu0 %v1107
        %v1262 = vpop.f32.mrb[0].mxu0
        %v1263 = vadd.f32 %v1130, %v1262
        %v1264 = vpop.f32.mrb[0].mxu0
        %v1265 = vpop.f32.mrb[0].mxu0
        %v1266 = vadd.f32 %v1130, %v1265
        %v1267 = vpop.f32.mrb[0].mxu0
        %1268 = vmatprep.mubr.bf16.mxu0 0
        %1269 = vmatmul.mubr.bf16.gmra.mrb[0].mxu0 %v1108
        %v1270 = vpop.f32.mrb[0].mxu0
        %v1271 = vadd.f32 %v1130, %v1270
        %v1272 = vpop.f32.mrb[0].mxu0
        %v1273 = vpop.f32.mrb[0].mxu0
        %v1274 = vadd.f32 %v1130, %v1273
        %v1275 = vpop.f32.mrb[0].mxu0
        %1276 = vdwg.mxu0
        %v1277 = vmax.f32 %v1215, 0.0
        %v1278 = vmax.f32 %v1218, 0.0
        %v1279 = vmax.f32 %v1223, 0.0
        %v1280 = vmax.f32 %v1226, 0.0
        %v1281 = vmax.f32 %v1231, 0.0
        %v1282 = vmax.f32 %v1234, 0.0
        %v1283 = vmax.f32 %v1239, 0.0
        %v1284 = vmax.f32 %v1242, 0.0
        %v1285 = vmax.f32 %v1247, 0.0
        %v1286 = vmax.f32 %v1250, 0.0
        %v1287 = vmax.f32 %v1255, 0.0
        %v1288 = vmax.f32 %v1258, 0.0
        %v1289 = vmax.f32 %v1263, 0.0
        %v1290 = vmax.f32 %v1266, 0.0
        %v1291 = vmax.f32 %v1271, 0.0
        %v1292 = vmax.f32 %v1274, 0.0
        %v1293 = vpack.c.bf16 %v1278, %v1277
        %v1294 = vpack.c.bf16 %v1280, %v1279
        %v1295 = vpack.c.bf16 %v1282, %v1281
        %v1296 = vpack.c.bf16 %v1284, %v1283
        %v1297 = vpack.c.bf16 %v1286, %v1285
        %v1298 = vpack.c.bf16 %v1288, %v1287
        %v1299 = vpack.c.bf16 %v1290, %v1289
        %v1300 = vpack.c.bf16 %v1292, %v1291
        %v1301 = vld [vmem:[%s561] sm:$0xf]
        %v1302 = vld [vmem:[%s561 + $0x4] sm:$0xf]
        %v1303 = vld [vmem:[%s561 + $0x8] sm:$0xf]
        %v1304 = vld [vmem:[%s561 + $0xc] sm:$0xf]
        %v1305 = vld [vmem:[%s561 + $0x10] sm:$0xf]
        %v1306 = vld [vmem:[%s561 + $0x14] sm:$0xf]
        %v1307 = vld [vmem:[%s561 + $0x18] sm:$0xf]
        %v1308 = vld [vmem:[%s561 + $0x1c] sm:$0xf]
        %v1309 = vld [vmem:[%s561 + $0x20] sm:$0xf]
        %v1310 = vld [vmem:[%s561 + $0x24] sm:$0xf]
        %v1311 = vld [vmem:[%s561 + $0x28] sm:$0xf]
        %v1312 = vld [vmem:[%s561 + $0x2c] sm:$0xf]
        %v1313 = vld [vmem:[%s561 + $0x30] sm:$0xf]
        %v1314 = vld [vmem:[%s561 + $0x34] sm:$0xf]
        %v1315 = vld [vmem:[%s561 + $0x38] sm:$0xf]
        %v1316 = vld [vmem:[%s561 + $0x3c] sm:$0xf]
        %v1317 = vld [vmem:[%s630] sm:$0x1]
        %v1319 = vlaneseq
        %v1320 = vshrl.u32 %v1319, 7
        %v1321 = vsub.s32 0, %v1320
        %v1322 = vrot.slane %v1317, %v1321
        %v1340 = vunpack.c.l.b16 %v1301
        %v1341 = vunpack.c.l.b16 %v1302
        %v1342 = vunpack.c.l.b16 %v1303
        %v1343 = vunpack.c.l.b16 %v1304
        %v1344 = vunpack.c.l.b16 %v1305
        %v1345 = vunpack.c.l.b16 %v1306
        %v1346 = vunpack.c.l.b16 %v1307
        %v1347 = vunpack.c.l.b16 %v1308
        %v1348 = vunpack.c.l.b16 %v1309
        %v1349 = vunpack.c.l.b16 %v1310
        %v1350 = vunpack.c.l.b16 %v1311
        %v1351 = vunpack.c.l.b16 %v1312
        %v1352 = vunpack.c.l.b16 %v1313
        %v1353 = vunpack.c.l.b16 %v1314
        %v1354 = vunpack.c.l.b16 %v1315
        %v1355 = vunpack.c.l.b16 %v1316
        %v1356 = vpack.c.b16 %v1341, %v1340
        %v1357 = vpack.c.b16 %v1343, %v1342
        %v1358 = vpack.c.b16 %v1345, %v1344
        %v1359 = vpack.c.b16 %v1347, %v1346
        %v1360 = vpack.c.b16 %v1349, %v1348
        %v1361 = vpack.c.b16 %v1351, %v1350
        %v1362 = vpack.c.b16 %v1353, %v1352
        %v1363 = vpack.c.b16 %v1355, %v1354
        %1372 = vmatprep.subr.bf16.mxu0 0
        %1373 = vmatpush1.bf16.msra.mxu0 %v1356
        %1374 = vmatprep.subr.bf16.mxu0 0
        %1375 = vmatpush1.bf16.msra.mxu0 %v1357
        %1376 = vmatprep.subr.bf16.mxu0 0
        %1377 = vmatpush1.bf16.msra.mxu0 %v1358
        %1378 = vmatprep.subr.bf16.mxu0 0
        %1379 = vmatpush1.bf16.msra.mxu0 %v1359
        %1380 = vmatprep.subr.bf16.mxu0 0
        %1381 = vmatpush1.bf16.msra.mxu0 %v1360
        %1382 = vmatprep.subr.bf16.mxu0 0
        %1383 = vmatpush1.bf16.msra.mxu0 %v1361
        %1384 = vmatprep.subr.bf16.mxu0 0
        %1385 = vmatpush1.bf16.msra.mxu0 %v1362
        %1386 = vmatprep.subr.bf16.mxu0 0
        %1387 = vmatpush1.bf16.msra.mxu0 %v1363
        %1388 = vmatprep.subr.bf16.mxu0 0
        %1389 = vmatpush1.bf16.msra.mxu0 0
        %1390 = vmatprep.subr.bf16.mxu0 0
        %1391 = vmatpush1.bf16.msra.mxu0 0
        %1392 = vmatprep.subr.bf16.mxu0 0
        %1393 = vmatpush1.bf16.msra.mxu0 0
        %1394 = vmatprep.subr.bf16.mxu0 0
        %1395 = vmatpush1.bf16.msra.mxu0 0
        %1396 = vmatprep.subr.bf16.mxu0 0
        %1397 = vmatpush1.bf16.msra.mxu0 0
        %1398 = vmatprep.subr.bf16.mxu0 0
        %1399 = vmatpush1.bf16.msra.mxu0 0
        %1400 = vmatprep.subr.bf16.mxu0 0
        %1401 = vmatpush1.bf16.msra.mxu0 0
        %1402 = vmatprep.subr.bf16.mxu0 0
        %1403 = vmatpush1.bf16.msra.mxu0 0
        %1404 = vmatprep.mubr.bf16.mxu0 0
        %1405 = vmatmul.mubr.bf16.gmra.mrb[0].mxu0 %v1293
        %v1406 = vpop.f32.mrb[0].mxu0
        %v1407 = vadd.f32 %v1322, %v1406
        %v1408 = vpop.f32.mrb[0].mxu0
        %v1409 = vpop.f32.mrb[0].mxu0
        %v1410 = vadd.f32 %v1322, %v1409
        %v1411 = vpop.f32.mrb[0].mxu0
        %1412 = vmatprep.mubr.bf16.mxu0 0
        %1413 = vmatmul.mubr.bf16.gmra.mrb[0].mxu0 %v1294
        %v1414 = vpop.f32.mrb[0].mxu0
        %v1415 = vadd.f32 %v1322, %v1414
        %v1416 = vpop.f32.mrb[0].mxu0
        %v1417 = vpop.f32.mrb[0].mxu0
        %v1418 = vadd.f32 %v1322, %v1417
        %v1419 = vpop.f32.mrb[0].mxu0
        %1420 = vmatprep.mubr.bf16.mxu0 0
        %1421 = vmatmul.mubr.bf16.gmra.mrb[0].mxu0 %v1295
        %v1422 = vpop.f32.mrb[0].mxu0
        %v1423 = vadd.f32 %v1322, %v1422
        %v1424 = vpop.f32.mrb[0].mxu0
        %v1425 = vpop.f32.mrb[0].mxu0
        %v1426 = vadd.f32 %v1322, %v1425
        %v1427 = vpop.f32.mrb[0].mxu0
        %1428 = vmatprep.mubr.bf16.mxu0 0
        %1429 = vmatmul.mubr.bf16.gmra.mrb[0].mxu0 %v1296
        %v1430 = vpop.f32.mrb[0].mxu0
        %v1431 = vadd.f32 %v1322, %v1430
        %v1432 = vpop.f32.mrb[0].mxu0
        %v1433 = vpop.f32.mrb[0].mxu0
        %v1434 = vadd.f32 %v1322, %v1433
        %v1435 = vpop.f32.mrb[0].mxu0
        %1436 = vmatprep.mubr.bf16.mxu0 0
        %1437 = vmatmul.mubr.bf16.gmra.mrb[0].mxu0 %v1297
        %v1438 = vpop.f32.mrb[0].mxu0
        %v1439 = vadd.f32 %v1322, %v1438
        %v1440 = vpop.f32.mrb[0].mxu0
        %v1441 = vpop.f32.mrb[0].mxu0
        %v1442 = vadd.f32 %v1322, %v1441
        %v1443 = vpop.f32.mrb[0].mxu0
        %1444 = vmatprep.mubr.bf16.mxu0 0
        %1445 = vmatmul.mubr.bf16.gmra.mrb[0].mxu0 %v1298
        %v1446 = vpop.f32.mrb[0].mxu0
        %v1447 = vadd.f32 %v1322, %v1446
        %v1448 = vpop.f32.mrb[0].mxu0
        %v1449 = vpop.f32.mrb[0].mxu0
        %v1450 = vadd.f32 %v1322, %v1449
        %v1451 = vpop.f32.mrb[0].mxu0
        %1452 = vmatprep.mubr.bf16.mxu0 0
        %1453 = vmatmul.mubr.bf16.gmra.mrb[0].mxu0 %v1299
        %v1454 = vpop.f32.mrb[0].mxu0
        %v1455 = vadd.f32 %v1322, %v1454
        %v1456 = vpop.f32.mrb[0].mxu0
        %v1457 = vpop.f32.mrb[0].mxu0
        %v1458 = vadd.f32 %v1322, %v1457
        %v1459 = vpop.f32.mrb[0].mxu0
        %1460 = vmatprep.mubr.bf16.mxu0 0
        %1461 = vmatmul.mubr.bf16.gmra.mrb[0].mxu0 %v1300
        %v1462 = vpop.f32.mrb[0].mxu0
        %v1463 = vadd.f32 %v1322, %v1462
        %v1464 = vpop.f32.mrb[0].mxu0
        %v1465 = vpop.f32.mrb[0].mxu0
        %v1466 = vadd.f32 %v1322, %v1465
        %v1467 = vpop.f32.mrb[0].mxu0
        %1468 = vdwg.mxu0
        %v1469 = vmax.f32 %v1407, 0.0
        %v1470 = vmax.f32 %v1410, 0.0
        %v1471 = vmax.f32 %v1415, 0.0
        %v1472 = vmax.f32 %v1418, 0.0
        %v1473 = vmax.f32 %v1423, 0.0
        %v1474 = vmax.f32 %v1426, 0.0
        %v1475 = vmax.f32 %v1431, 0.0
        %v1476 = vmax.f32 %v1434, 0.0
        %v1477 = vmax.f32 %v1439, 0.0
        %v1478 = vmax.f32 %v1442, 0.0
        %v1479 = vmax.f32 %v1447, 0.0
        %v1480 = vmax.f32 %v1450, 0.0
        %v1481 = vmax.f32 %v1455, 0.0
        %v1482 = vmax.f32 %v1458, 0.0
        %v1483 = vmax.f32 %v1463, 0.0
        %v1484 = vmax.f32 %v1466, 0.0
        %v1485 = vld [vmem:[%s633] sm:$0x1]
        %v1487 = vlaneseq
        %v1488 = vshrl.u32 %v1487, 7
        %v1489 = vsub.s32 0, %v1488
        %v1490 = vrot.slane %v1485, %v1489
        %v1492 = vmul.f32 %v1469, %v1490
        %v1493 = vmul.f32 %v1470, %v1490
        %v1494 = vmul.f32 %v1471, %v1490
        %v1495 = vmul.f32 %v1472, %v1490
        %v1496 = vmul.f32 %v1473, %v1490
        %v1497 = vmul.f32 %v1474, %v1490
        %v1498 = vmul.f32 %v1475, %v1490
        %v1499 = vmul.f32 %v1476, %v1490
        %v1500 = vmul.f32 %v1477, %v1490
        %v1501 = vmul.f32 %v1478, %v1490
        %v1502 = vmul.f32 %v1479, %v1490
        %v1503 = vmul.f32 %v1480, %v1490
        %v1504 = vmul.f32 %v1481, %v1490
        %v1505 = vmul.f32 %v1482, %v1490
        %v1506 = vmul.f32 %v1483, %v1490
        %v1507 = vmul.f32 %v1484, %v1490
        %v1508 = vld [vmem:[%s636] sm:$0x1]
        %v1510 = vlaneseq
        %v1511 = vshrl.u32 %v1510, 7
        %v1512 = vsub.s32 0, %v1511
        %v1513 = vrot.slane %v1508, %v1512
        %v1515 = vadd.f32 %v1492, %v1513
        %v1516 = vadd.f32 %v1493, %v1513
        %v1517 = vadd.f32 %v1494, %v1513
        %v1518 = vadd.f32 %v1495, %v1513
        %v1519 = vadd.f32 %v1496, %v1513
        %v1520 = vadd.f32 %v1497, %v1513
        %v1521 = vadd.f32 %v1498, %v1513
        %v1522 = vadd.f32 %v1499, %v1513
        %v1523 = vadd.f32 %v1500, %v1513
        %v1524 = vadd.f32 %v1501, %v1513
        %v1525 = vadd.f32 %v1502, %v1513
        %v1526 = vadd.f32 %v1503, %v1513
        %v1527 = vadd.f32 %v1504, %v1513
        %v1528 = vadd.f32 %v1505, %v1513
        %v1529 = vadd.f32 %v1506, %v1513
        %v1530 = vadd.f32 %v1507, %v1513
        %v1531 = vmax.f32 %v1515, 0.0
        %v1532 = vmax.f32 %v1516, 0.0
        %v1533 = vmax.f32 %v1517, 0.0
        %v1534 = vmax.f32 %v1518, 0.0
        %v1535 = vmax.f32 %v1519, 0.0
        %v1536 = vmax.f32 %v1520, 0.0
        %v1537 = vmax.f32 %v1521, 0.0
        %v1538 = vmax.f32 %v1522, 0.0
        %v1539 = vmax.f32 %v1523, 0.0
        %v1540 = vmax.f32 %v1524, 0.0
        %v1541 = vmax.f32 %v1525, 0.0
        %v1542 = vmax.f32 %v1526, 0.0
        %v1543 = vmax.f32 %v1527, 0.0
        %v1544 = vmax.f32 %v1528, 0.0
        %v1545 = vmax.f32 %v1529, 0.0
        %v1546 = vmax.f32 %v1530, 0.0
        %1547 = vst [vmem:[#allocation2] sm:$0xff] %v1531
        %1548 = vst [vmem:[#allocation2 + $0x8] sm:$0xff] %v1532
        %1549 = vst [vmem:[#allocation2 + $0x10] sm:$0xff] %v1533
        %1550 = vst [vmem:[#allocation2 + $0x18] sm:$0xff] %v1534
        %1551 = vst [vmem:[#allocation2 + $0x20] sm:$0xff] %v1535
        %1552 = vst [vmem:[#allocation2 + $0x28] sm:$0xff] %v1536
        %1553 = vst [vmem:[#allocation2 + $0x30] sm:$0xff] %v1537
        %1554 = vst [vmem:[#allocation2 + $0x38] sm:$0xff] %v1538
        %1555 = vst [vmem:[#allocation2 + $0x40] sm:$0xff] %v1539
        %1556 = vst [vmem:[#allocation2 + $0x48] sm:$0xff] %v1540
        %1557 = vst [vmem:[#allocation2 + $0x50] sm:$0xff] %v1541
        %1558 = vst [vmem:[#allocation2 + $0x58] sm:$0xff] %v1542
        %1559 = vst [vmem:[#allocation2 + $0x60] sm:$0xff] %v1543
        %1560 = vst [vmem:[#allocation2 + $0x68] sm:$0xff] %v1544
        %1561 = vst [vmem:[#allocation2 + $0x70] sm:$0xff] %v1545
        %1562 = vst [vmem:[#allocation2 + $0x78] sm:$0xff] %v1546
        %p1563 = scmp.eq.s32.totalorder %s32, 1
        // Predicated region
        $region105: #{tpu_custom_call.1} parent=75 // pred_check
          %p1564 = pneg %p1563
        $region106: #{tpu_custom_call.1} parent=75 // pred_check_branch
          %1566 = sbr.rel (%p1564) target = $region108
        $region107: #{tpu_custom_call.1} parent=75 // pred_region
          %v1567 = vld [vmem:[%s11] sm:$0xf]
          %v1568 = vld [vmem:[#allocation2] sm:$0xff]
          %v1569 = vld [vmem:[#allocation2 + $0x8] sm:$0xff]
          %v1570 = vld [vmem:[#allocation2 + $0x10] sm:$0xff]
          %v1571 = vld [vmem:[#allocation2 + $0x18] sm:$0xff]
          %v1572 = vld [vmem:[#allocation2 + $0x20] sm:$0xff]
          %v1573 = vld [vmem:[#allocation2 + $0x28] sm:$0xff]
          %v1574 = vld [vmem:[#allocation2 + $0x30] sm:$0xff]
          %v1575 = vld [vmem:[#allocation2 + $0x38] sm:$0xff]
          %v1576 = vld [vmem:[#allocation2 + $0x40] sm:$0xff]
          %v1577 = vld [vmem:[#allocation2 + $0x48] sm:$0xff]
          %v1578 = vld [vmem:[#allocation2 + $0x50] sm:$0xff]
          %v1579 = vld [vmem:[#allocation2 + $0x58] sm:$0xff]
          %v1580 = vld [vmem:[#allocation2 + $0x60] sm:$0xff]
          %v1581 = vld [vmem:[#allocation2 + $0x68] sm:$0xff]
          %v1582 = vld [vmem:[#allocation2 + $0x70] sm:$0xff]
          %v1583 = vld [vmem:[#allocation2 + $0x78] sm:$0xff]
          %v1584 = vpack.c.bf16 %v1569, %v1568
          %v1585 = vpack.c.bf16 %v1571, %v1570
          %v1586 = vpack.c.bf16 %v1573, %v1572
          %v1587 = vpack.c.bf16 %v1575, %v1574
          %v1588 = vpack.c.bf16 %v1577, %v1576
          %v1589 = vpack.c.bf16 %v1579, %v1578
          %v1590 = vpack.c.bf16 %v1581, %v1580
          %v1591 = vpack.c.bf16 %v1583, %v1582
          %1592 = vmatprep.subr.bf16.mxu0 0
          %1593 = vmatpush1.bf16.msra.mxu0 %v1584
          %1594 = vmatprep.subr.bf16.mxu0 0
          %1595 = vmatpush1.bf16.msra.mxu0 %v1585
          %1596 = vmatprep.subr.bf16.mxu0 0
          %1597 = vmatpush1.bf16.msra.mxu0 %v1586
          %1598 = vmatprep.subr.bf16.mxu0 0
          %1599 = vmatpush1.bf16.msra.mxu0 %v1587
          %1600 = vmatprep.subr.bf16.mxu0 0
          %1601 = vmatpush1.bf16.msra.mxu0 %v1588
          %1602 = vmatprep.subr.bf16.mxu0 0
          %1603 = vmatpush1.bf16.msra.mxu0 %v1589
          %1604 = vmatprep.subr.bf16.mxu0 0
          %1605 = vmatpush1.bf16.msra.mxu0 %v1590
          %1606 = vmatprep.subr.bf16.mxu0 0
          %1607 = vmatpush1.bf16.msra.mxu0 %v1591
          %1608 = vmatprep.subr.bf16.mxu0 0
          %1609 = vmatpush1.bf16.msra.mxu0 0
          %1610 = vmatprep.subr.bf16.mxu0 0
          %1611 = vmatpush1.bf16.msra.mxu0 0
          %1612 = vmatprep.subr.bf16.mxu0 0
          %1613 = vmatpush1.bf16.msra.mxu0 0
          %1614 = vmatprep.subr.bf16.mxu0 0
          %1615 = vmatpush1.bf16.msra.mxu0 0
          %1616 = vmatprep.subr.bf16.mxu0 0
          %1617 = vmatpush1.bf16.msra.mxu0 0
          %1618 = vmatprep.subr.bf16.mxu0 0
          %1619 = vmatpush1.bf16.msra.mxu0 0
          %1620 = vmatprep.subr.bf16.mxu0 0
          %1621 = vmatpush1.bf16.msra.mxu0 0
          %1622 = vmatprep.subr.bf16.mxu0 0
          %1623 = vmatpush1.bf16.msra.mxu0 0
          %1624 = vmatprep.mubr.bf16.mxu0 0
          %1625 = vmatmul.mubr.bf16.gmra.mrb[0].mxu0 %v1567
          %v1626 = vpop.f32.mrb[0].mxu0
          %v1627 = vadd.f32 0.0, %v1626
          %v1628 = vpop.f32.mrb[0].mxu0
          %v1629 = vpop.f32.mrb[0].mxu0
          %v1630 = vpop.f32.mrb[0].mxu0
          %1631 = vdwg.mxu0
          %v1632 = vpack.c.bf16 %v1627, %v1627
          %v1633 = vld [vmem:[#allocation12] sm:$0xf]
          %v1634 = vld [vmem:[#allocation12 + $0x4] sm:$0xf]
          %v1635 = vld [vmem:[#allocation12 + $0x8] sm:$0xf]
          %v1636 = vld [vmem:[#allocation12 + $0xc] sm:$0xf]
          %v1637 = vld [vmem:[#allocation12 + $0x10] sm:$0xf]
          %v1638 = vld [vmem:[#allocation12 + $0x14] sm:$0xf]
          %v1639 = vld [vmem:[#allocation12 + $0x18] sm:$0xf]
          %v1640 = vld [vmem:[#allocation12 + $0x1c] sm:$0xf]
          %v1641 = vld [vmem:[#allocation12 + $0x20] sm:$0xf]
          %v1642 = vld [vmem:[#allocation12 + $0x24] sm:$0xf]
          %v1643 = vld [vmem:[#allocation12 + $0x28] sm:$0xf]
          %v1644 = vld [vmem:[#allocation12 + $0x2c] sm:$0xf]
          %v1645 = vld [vmem:[#allocation12 + $0x30] sm:$0xf]
          %v1646 = vld [vmem:[#allocation12 + $0x34] sm:$0xf]
          %v1647 = vld [vmem:[#allocation12 + $0x38] sm:$0xf]
          %v1648 = vld [vmem:[#allocation12 + $0x3c] sm:$0xf]
          %v1649 = vld [vmem:[%s13] sm:$0x1]
          %v1651 = vlaneseq
          %v1652 = vshrl.u32 %v1651, 7
          %v1653 = vsub.s32 0, %v1652
          %v1654 = vrot.slane %v1649, %v1653
          %v1672 = vunpack.c.l.b16 %v1633
          %v1673 = vunpack.c.l.b16 %v1634
          %v1674 = vunpack.c.l.b16 %v1635
          %v1675 = vunpack.c.l.b16 %v1636
          %v1676 = vunpack.c.l.b16 %v1637
          %v1677 = vunpack.c.l.b16 %v1638
          %v1678 = vunpack.c.l.b16 %v1639
          %v1679 = vunpack.c.l.b16 %v1640
          %v1680 = vunpack.c.l.b16 %v1641
          %v1681 = vunpack.c.l.b16 %v1642
          %v1682 = vunpack.c.l.b16 %v1643
          %v1683 = vunpack.c.l.b16 %v1644
          %v1684 = vunpack.c.l.b16 %v1645
          %v1685 = vunpack.c.l.b16 %v1646
          %v1686 = vunpack.c.l.b16 %v1647
          %v1687 = vunpack.c.l.b16 %v1648
          %v1688 = vpack.c.b16 %v1673, %v1672
          %v1689 = vpack.c.b16 %v1675, %v1674
          %v1690 = vpack.c.b16 %v1677, %v1676
          %v1691 = vpack.c.b16 %v1679, %v1678
          %v1692 = vpack.c.b16 %v1681, %v1680
          %v1693 = vpack.c.b16 %v1683, %v1682
          %v1694 = vpack.c.b16 %v1685, %v1684
          %v1695 = vpack.c.b16 %v1687, %v1686
          %1704 = vmatprep.subr.bf16.mxu0 0
          %1705 = vmatpush1.bf16.msra.mxu0 %v1688
          %1706 = vmatprep.subr.bf16.mxu0 0
          %1707 = vmatpush1.bf16.msra.mxu0 %v1689
          %1708 = vmatprep.subr.bf16.mxu0 0
          %1709 = vmatpush1.bf16.msra.mxu0 %v1690
          %1710 = vmatprep.subr.bf16.mxu0 0
          %1711 = vmatpush1.bf16.msra.mxu0 %v1691
          %1712 = vmatprep.subr.bf16.mxu0 0
          %1713 = vmatpush1.bf16.msra.mxu0 %v1692
          %1714 = vmatprep.subr.bf16.mxu0 0
          %1715 = vmatpush1.bf16.msra.mxu0 %v1693
          %1716 = vmatprep.subr.bf16.mxu0 0
          %1717 = vmatpush1.bf16.msra.mxu0 %v1694
          %1718 = vmatprep.subr.bf16.mxu0 0
          %1719 = vmatpush1.bf16.msra.mxu0 %v1695
          %1720 = vmatprep.subr.bf16.mxu0 0
          %1721 = vmatpush1.bf16.msra.mxu0 0
          %1722 = vmatprep.subr.bf16.mxu0 0
          %1723 = vmatpush1.bf16.msra.mxu0 0
          %1724 = vmatprep.subr.bf16.mxu0 0
          %1725 = vmatpush1.bf16.msra.mxu0 0
          %1726 = vmatprep.subr.bf16.mxu0 0
          %1727 = vmatpush1.bf16.msra.mxu0 0
          %1728 = vmatprep.subr.bf16.mxu0 0
          %1729 = vmatpush1.bf16.msra.mxu0 0
          %1730 = vmatprep.subr.bf16.mxu0 0
          %1731 = vmatpush1.bf16.msra.mxu0 0
          %1732 = vmatprep.subr.bf16.mxu0 0
          %1733 = vmatpush1.bf16.msra.mxu0 0
          %1734 = vmatprep.subr.bf16.mxu0 0
          %1735 = vmatpush1.bf16.msra.mxu0 0
          %1736 = vmatprep.mubr.bf16.mxu0 0
          %1737 = vmatmul.mubr.bf16.gmra.mrb[0].mxu0 %v1632
          %v1738 = vpop.f32.mrb[0].mxu0
          %v1739 = vadd.f32 %v1654, %v1738
          %v1740 = vpop.f32.mrb[0].mxu0
          %v1741 = vpop.f32.mrb[0].mxu0
          %v1742 = vpop.f32.mrb[0].mxu0
          %1743 = vdwg.mxu0
          %1744 = vst [vmem:[#allocation14] sm:$0xff] %v1739
        $region108: #{tpu_custom_call.1} parent=75 // pred_fallthru
          _
        // Predicated region
        $region109: #{tpu_custom_call.1} parent=75 // pred_check
          %p1745 = pneg %p374
        $region110: #{tpu_custom_call.1} parent=75 // pred_check_branch
          %1747 = sbr.rel (%p1745) target = $region112
        $region111: #{tpu_custom_call.1} parent=75 // pred_region
          %s1749 = ssub.s32 128, 128
          %1750 = vsyncadd [#allocation5], %s1749
          %s1752 = sshll.u32 [#allocation14], 4
          %s1753 = int_to_ptr.vmem [resolvable:$true] %s1752
          %1755 = dma.vmem_to_hbm [thread:$0]  %s1753, 128, %s14, [#allocation5]
        $region112: #{tpu_custom_call.1} parent=75 // pred_fallthru
          _
        // Predicated region
        $region113: #{tpu_custom_call.1} parent=75 // pred_check
          %p1756 = pneg %p374
        $region114: #{tpu_custom_call.1} parent=75 // pred_check_branch
          %1758 = sbr.rel (%p1756) target = $region116
        $region115: #{tpu_custom_call.1} parent=75 // pred_region
          %1759 = dma.done [#allocation5], 128
        $region116: #{tpu_custom_call.1} parent=75 // pred_fallthru
          _
      $region76: #{tpu_custom_call.1} parent=5 // pred_fallthru
        _
      %p1760 = scmp.le.s32.totalorder 2, %s27
      // Predicated region
      $region117: #{tpu_custom_call.1} parent=5 // pred_check
        %p1761 = pneg %p1760
      $region118: #{tpu_custom_call.1} parent=5 // pred_check_branch
        %1763 = sbr.rel (%p1761) target = $region120
      $region119: #{tpu_custom_call.1} parent=5 // pred_region
        %s1764 = ssub.s32 %s27, 2
      $region120: #{tpu_custom_call.1} parent=5 // pred_fallthru
        _
    $region6: #{tpu_custom_call.1} parent=1 // loop_footer
      %s31 = sadd.s32 1, %s27
    $region7: #{tpu_custom_call.1} parent=1 // loop_footer_branch
      %26 = sbr.rel target = $region3
    $region8: #{tpu_custom_call.1} parent=1 // loop_exit
      _
    %1765 = vsyncpa [#allocation4], 1
    %s1766 = scalar_lea.sflag [#allocation4], 1
    %1767 = vsyncpa %s1766, 1
    %1768 = vsyncpa [#allocation7], 1
    %1769 = vsyncpa [#allocation10], 1
    %s1770 = scalar_lea.sflag [#allocation10], 1
    %1771 = vsyncpa %s1770, 1
    %1772 = vsyncpa [#allocation13], 1
    %1773 = vsyncpa [#allocation5], 1
    %s1774 = scalar_lea.sflag [#allocation5], 1
    %1775 = vsyncpa %s1774, 1

</llo_original>
